<compile_context>
chip_gen: v7x
topology: tpu7x:2x2x1
jax: 0.10.0
libtpu: 0.0.40
codegen_flags: <defaults>
</compile_context>

<pallas_src>
import functools

import jax
import jax.numpy as jnp
from jax.experimental import pallas as pl
from jax.experimental.pallas import tpu as pltpu

EPS = 1e-5  # torch.nn.LayerNorm / apex FusedLayerNorm default


def _ln_onepass(x, gamma, beta):
    """LayerNorm over the last dim; single pass (independent XLU reductions)."""
    inv_d = jnp.float32(1.0 / x.shape[-1])
    s1 = jnp.sum(x, axis=-1, keepdims=True)
    s2 = jnp.sum(x * x, axis=-1, keepdims=True)
    mu = s1 * inv_d
    var = jnp.maximum(s2 * inv_d - mu * mu, 0.0)  # clamp: no NaN from cancellation
    return (x - mu) * jax.lax.rsqrt(var + EPS) * gamma + beta


def neuralnet_kernel(x_ref,   # (block_m, d_in) activations
                     p_ref,   # (8, Dp) packed [g1; b1; bias1; g2; b2; bias2; pad; pad]
                     w1_ref,  # (d_in, d_out) bf16, pre-transposed
                     w2_ref,  # (d_out, d_out) bf16, pre-transposed
                     o_ref):  # (block_m, d_out)
    d_in = x_ref.shape[1]
    d_out = w1_ref.shape[1]

    x = x_ref[...].astype(jnp.float32)
    p = p_ref[...]
    g1, b1 = p[0:1, :d_in], p[1:2, :d_in]
    bias1, g2, b2, bias2 = (p[2:3, :d_out], p[3:4, :d_out],
                            p[4:5, :d_out], p[5:6, :d_out])

    # norm = LayerNorm(d_in)
    x = _ln_onepass(x, g1, b1)

    # linear = Linear(d_in, d_out); relu  (bf16 MXU operands, f32 accumulate)
    h = jnp.dot(x.astype(jnp.bfloat16), w1_ref[...],
                preferred_element_type=jnp.float32) + bias1
    h = jnp.maximum(h, 0.0)

    # norm2 = FusedLayerNorm(d_out)  (semantically identical to LayerNorm)
    h = _ln_onepass(h, g2, b2)

    # linear2 = Linear(d_out, d_out)
    o = jnp.dot(h.astype(jnp.bfloat16), w2_ref[...],
                preferred_element_type=jnp.float32) + bias2

    # log_softmax over last dim (F.log_softmax default dim == 1 for 2-D input)
    m = jnp.max(o, axis=-1, keepdims=True)
    s = o - m
    lse = jnp.log(jnp.sum(jnp.exp(s), axis=-1, keepdims=True))
    o_ref[...] = (s - lse).astype(o_ref.dtype)


def _default_block_m(B):
    """Largest 128-multiple tile that divides B, capped at max(128, min(B//2, 1024))."""
    cap = max(128, min(B // 2, 1024))
    best = None
    cand = 128
    while cand <= cap:
        if B % cand == 0:
            best = cand
        cand += 128
    return best if best is not None else B  # fall back to one full-array block


@functools.partial(jax.jit,
                   static_argnames=("block_m", "out_dtype", "single_buffer_params"))
def _neuralnet_forward(x, p, w1, w2, *, block_m, out_dtype, single_buffer_params):
    B, d_in = x.shape
    d_out = w1.shape[1]
    dp = p.shape[1]

    if single_buffer_params:
        # Constant-index-map operands never change across grid steps; single-buffer
        # them to drop the redundant second VMEM buffer + swap bookkeeping.
        def resident(shape):
            return pl.BlockSpec(shape, lambda i: (0, 0),
                                pipeline_mode=pl.Buffered(buffer_count=1))
    else:
        def resident(shape):
            return pl.BlockSpec(shape, lambda i: (0, 0))

    out_itemsize = jnp.dtype(out_dtype).itemsize
    cost = pl.CostEstimate(
        flops=2 * B * d_in * d_out + 2 * B * d_out * d_out,
        transcendentals=B * (d_out + 3),
        bytes_accessed=(B * d_in * x.dtype.itemsize          # activations in
                        + B * d_out * out_itemsize           # activations out
                        + (d_in * d_out + d_out * d_out) * w1.dtype.itemsize
                        + 8 * dp * p.dtype.itemsize),
    )

    return pl.pallas_call(
        neuralnet_kernel,
        out_shape=jax.ShapeDtypeStruct((B, d_out), out_dtype),
        grid_spec=pltpu.PrefetchScalarGridSpec(
            num_scalar_prefetch=0,
            grid=(B // block_m,),
            in_specs=[
                pl.BlockSpec((block_m, d_in), lambda i: (i, 0)),  # x: row-tiled
                resident((8, dp)),                                # packed LN/bias vectors
                resident((d_in, d_out)),                          # W1 (VMEM-resident)
                resident((d_out, d_out)),                         # W2 (VMEM-resident)
            ],
            out_specs=pl.BlockSpec((block_m, d_out), lambda i: (i, 0)),
        ),
        compiler_params=pltpu.CompilerParams(
            # v7x: shard batch blocks across both TensorCores.
            dimension_semantics=("parallel",),
            # Only needed if a caller pushes the tile past ~2K rows (v5e scoped default).
            vmem_limit_bytes=(64 * 1024 * 1024) if block_m >= 2048 else None,
        ),
        cost_estimate=cost,
    )(x, p, w1, w2)


def neuralnet_forward(x, params, block_m=None, out_dtype=None):
    p, w1, w2 = params
    B = x.shape[0]
    if block_m is None:
        block_m = _default_block_m(B)
    if out_dtype is None:
        out_dtype = x.dtype
    assert B % block_m == 0, "B must be a multiple of block_m"
    try:
        return _neuralnet_forward(x, p, w1, w2, block_m=block_m,
                                  out_dtype=out_dtype, single_buffer_params=True)
    except Exception:
        # Fallback for JAX builds where pipeline_mode=pl.Buffered(1) is rejected by
        # the Mosaic lowering; default double-buffering is functionally identical.
        return _neuralnet_forward(x, p, w1, w2, block_m=block_m,
                                  out_dtype=out_dtype, single_buffer_params=False)


def init_params(key, d_in, d_out):
    k1, k2, k3, k4 = jax.random.split(key, 4)
    bound1 = 1.0 / float(d_in) ** 0.5
    bound2 = 1.0 / float(d_out) ** 0.5
    # Linear weights stored pre-transposed as (fan_in, fan_out), bf16 for the MXU.
    w1 = jax.random.uniform(k1, (d_in, d_out), jnp.float32,
                            -bound1, bound1).astype(jnp.bfloat16)
    bias1 = jax.random.uniform(k2, (d_out,), jnp.float32, -bound1, bound1)
    w2 = jax.random.uniform(k3, (d_out, d_out), jnp.float32,
                            -bound2, bound2).astype(jnp.bfloat16)
    bias2 = jax.random.uniform(k4, (d_out,), jnp.float32, -bound2, bound2)

    dp = max(d_in, d_out)

    def row(v):
        return jnp.zeros((dp,), jnp.float32).at[: v.shape[0]].set(v)

    # Single (8, Dp) sublane tile: gamma1, beta1, bias1, gamma2, beta2, bias2, pad, pad
    p = jnp.stack([
        row(jnp.ones((d_in,), jnp.float32)),    # LayerNorm(d_in) gamma (torch default 1)
        row(jnp.zeros((d_in,), jnp.float32)),   # LayerNorm(d_in) beta  (torch default 0)
        row(bias1),
        row(jnp.ones((d_out,), jnp.float32)),   # FusedLayerNorm(d_out) gamma
        row(jnp.zeros((d_out,), jnp.float32)),  # FusedLayerNorm(d_out) beta
        row(bias2),
        jnp.zeros((dp,), jnp.float32),
        jnp.zeros((dp,), jnp.float32),
    ], axis=0)
    return (p, w1, w2)


def reference_forward(x, params):
    """Pure-JAX reference with the same precision choices (bf16 matmul operands)."""
    p, w1, w2 = params
    d_in, d_out = w1.shape
    g1, b1 = p[0, :d_in], p[1, :d_in]
    bias1, g2, b2, bias2 = p[2, :d_out], p[3, :d_out], p[4, :d_out], p[5, :d_out]

    def ln(v, g, b):  # classic two-pass LayerNorm (matches torch semantics)
        mu = jnp.mean(v, axis=-1, keepdims=True)
        var = jnp.mean((v - mu) * (v - mu), axis=-1, keepdims=True)
        return (v - mu) * jax.lax.rsqrt(var + EPS) * g + b

    h = ln(x.astype(jnp.float32), g1, b1)
    h = jnp.dot(h.astype(jnp.bfloat16), w1, preferred_element_type=jnp.float32) + bias1
    h = jnp.maximum(h, 0.0)
    h = ln(h, g2, b2)
    o = jnp.dot(h.astype(jnp.bfloat16), w2, preferred_element_type=jnp.float32) + bias2
    return jax.nn.log_softmax(o, axis=-1)


if __name__ == "__main__":
    # Lane-dense feature dims (128); 256 batch rows -> block_m=128, 2 grid steps
    # (one per TensorCore on v7x, still pipelined on single-TC chips).
    B, D_IN, D_OUT = 256, 128, 128

    key = jax.random.PRNGKey(0)
    kx, kp = jax.random.split(key)
    x = jax.random.normal(kx, (B, D_IN), jnp.float32)
    params = init_params(kp, D_IN, D_OUT)

    # f32 path
    out = jax.block_until_ready(neuralnet_forward(x, params))
    ref = reference_forward(x, params)
    assert out.shape == (B, D_OUT)
    assert out.dtype == x.dtype
    assert jnp.allclose(out, ref, atol=2e-3, rtol=2e-3), \
        float(jnp.max(jnp.abs(out - ref)))

    # bf16 input/output path (halves the only per-step HBM streams).
    x_bf16 = x.astype(jnp.bfloat16)
    out_bf16 = jax.block_until_ready(neuralnet_forward(x_bf16, params))
    ref_bf16 = reference_forward(x_bf16, params)  # reference upcasts internally
    assert out_bf16.shape == (B, D_OUT)
    assert out_bf16.dtype == jnp.bfloat16
    assert jnp.allclose(out_bf16.astype(jnp.float32), ref_bf16,
                        atol=5e-2, rtol=5e-2), \
        float(jnp.max(jnp.abs(out_bf16.astype(jnp.float32) - ref_bf16)))

    print("KERNEL_OK")
</pallas_src>

<mosaic_0001>
module attributes {stable_mosaic.version = 11 : i64} {
  func.func @neuralnet_kernel(%arg0: i32, %arg1: memref<128x128xf32, #tpu.memory_space<vmem>>, %arg2: memref<8x128xf32, #tpu.memory_space<vmem>>, %arg3: memref<128x128xbf16, #tpu.memory_space<vmem>>, %arg4: memref<128x128xbf16, #tpu.memory_space<vmem>>, %arg5: memref<128x128xf32, #tpu.memory_space<vmem>>) attributes {dimension_semantics = [#tpu.dimension_semantics<parallel>], iteration_bounds = array<i64: 2>, scalar_prefetch = 0 : i64, scratch_operands = 0 : i64, tpu.core_type = #tpu.core_type<tc>, window_params = [{transform_indices = @transform_0, window_bounds = array<i64: 128, 128>}, {pipeline_mode = #tpu.pipeline_mode<synchronous>, transform_indices = @transform_1, window_bounds = array<i64: 8, 128>}, {pipeline_mode = #tpu.pipeline_mode<synchronous>, transform_indices = @transform_2, window_bounds = array<i64: 128, 128>}, {pipeline_mode = #tpu.pipeline_mode<synchronous>, transform_indices = @transform_3, window_bounds = array<i64: 128, 128>}, {transform_indices = @transform_4, window_bounds = array<i64: 128, 128>}]} {
    %c0 = arith.constant 0 : index
    %c0_0 = arith.constant 0 : index
    %0 = vector.load %arg1[%c0, %c0_0] : memref<128x128xf32, #tpu.memory_space<vmem>>, vector<128x128xf32>
    %c0_1 = arith.constant 0 : index
    %c0_2 = arith.constant 0 : index
    %1 = vector.load %arg2[%c0_1, %c0_2] : memref<8x128xf32, #tpu.memory_space<vmem>>, vector<8x128xf32>
    %2 = vector.extract_strided_slice %1 {offsets = [0, 0], sizes = [1, 128], strides = [1, 1]} : vector<8x128xf32> to vector<1x128xf32>
    %3 = vector.extract_strided_slice %1 {offsets = [1, 0], sizes = [1, 128], strides = [1, 1]} : vector<8x128xf32> to vector<1x128xf32>
    %4 = vector.extract_strided_slice %1 {offsets = [2, 0], sizes = [1, 128], strides = [1, 1]} : vector<8x128xf32> to vector<1x128xf32>
    %5 = vector.extract_strided_slice %1 {offsets = [3, 0], sizes = [1, 128], strides = [1, 1]} : vector<8x128xf32> to vector<1x128xf32>
    %6 = vector.extract_strided_slice %1 {offsets = [4, 0], sizes = [1, 128], strides = [1, 1]} : vector<8x128xf32> to vector<1x128xf32>
    %7 = vector.extract_strided_slice %1 {offsets = [5, 0], sizes = [1, 128], strides = [1, 1]} : vector<8x128xf32> to vector<1x128xf32>
    %cst = arith.constant dense<0.000000e+00> : vector<128xf32>
    %8 = vector.multi_reduction <add>, %0, %cst [1] : vector<128x128xf32> to vector<128xf32>
    %9 = vector.shape_cast %8 : vector<128xf32> to vector<128x1xf32>
    %10 = arith.mulf %0, %0 : vector<128x128xf32>
    %cst_3 = arith.constant dense<0.000000e+00> : vector<128xf32>
    %11 = vector.multi_reduction <add>, %10, %cst_3 [1] : vector<128x128xf32> to vector<128xf32>
    %12 = vector.shape_cast %11 : vector<128xf32> to vector<128x1xf32>
    %cst_4 = arith.constant 7.812500e-03 : f32
    %13 = vector.broadcast %cst_4 : f32 to vector<128x1xf32>
    %14 = arith.mulf %9, %13 : vector<128x1xf32>
    %cst_5 = arith.constant 7.812500e-03 : f32
    %15 = vector.broadcast %cst_5 : f32 to vector<128x1xf32>
    %16 = arith.mulf %12, %15 : vector<128x1xf32>
    %17 = arith.mulf %14, %14 : vector<128x1xf32>
    %18 = arith.subf %16, %17 : vector<128x1xf32>
    %cst_6 = arith.constant 0.000000e+00 : f32
    %19 = vector.broadcast %cst_6 : f32 to vector<128x1xf32>
    %20 = arith.maximumf %18, %19 : vector<128x1xf32>
    %21 = vector.broadcast %14 : vector<128x1xf32> to vector<128x128xf32>
    %22 = arith.subf %0, %21 : vector<128x128xf32>
    %cst_7 = arith.constant 9.99999974E-6 : f32
    %23 = vector.broadcast %cst_7 : f32 to vector<128x1xf32>
    %24 = arith.addf %20, %23 : vector<128x1xf32>
    %25 = math.rsqrt %24 : vector<128x1xf32>
    %26 = vector.broadcast %25 : vector<128x1xf32> to vector<128x128xf32>
    %27 = arith.mulf %22, %26 : vector<128x128xf32>
    %28 = vector.broadcast %2 : vector<1x128xf32> to vector<128x128xf32>
    %29 = arith.mulf %27, %28 : vector<128x128xf32>
    %30 = vector.broadcast %3 : vector<1x128xf32> to vector<128x128xf32>
    %31 = arith.addf %29, %30 : vector<128x128xf32>
    %32 = arith.truncf %31 : vector<128x128xf32> to vector<128x128xbf16>
    %c0_8 = arith.constant 0 : index
    %c0_9 = arith.constant 0 : index
    %33 = vector.load %arg3[%c0_8, %c0_9] : memref<128x128xbf16, #tpu.memory_space<vmem>>, vector<128x128xbf16>
    %cst_10 = arith.constant dense<0.000000e+00> : vector<128x128xf32>
    %34 = tpu.matmul %32, %33, %cst_10 {dimension_numbers = #tpu.dot_dimension_numbers<[1], [0], [0], [1], [0, 0, 1, 1], [], []>} : vector<128x128xbf16>, vector<128x128xbf16>, vector<128x128xf32> -> vector<128x128xf32>
    %35 = vector.broadcast %4 : vector<1x128xf32> to vector<128x128xf32>
    %36 = arith.addf %34, %35 : vector<128x128xf32>
    %cst_11 = arith.constant 0.000000e+00 : f32
    %37 = vector.broadcast %cst_11 : f32 to vector<128x128xf32>
    %38 = arith.maximumf %36, %37 : vector<128x128xf32>
    %cst_12 = arith.constant dense<0.000000e+00> : vector<128xf32>
    %39 = vector.multi_reduction <add>, %38, %cst_12 [1] : vector<128x128xf32> to vector<128xf32>
    %40 = vector.shape_cast %39 : vector<128xf32> to vector<128x1xf32>
    %41 = arith.mulf %38, %38 : vector<128x128xf32>
    %cst_13 = arith.constant dense<0.000000e+00> : vector<128xf32>
    %42 = vector.multi_reduction <add>, %41, %cst_13 [1] : vector<128x128xf32> to vector<128xf32>
    %43 = vector.shape_cast %42 : vector<128xf32> to vector<128x1xf32>
    %cst_14 = arith.constant 7.812500e-03 : f32
    %44 = vector.broadcast %cst_14 : f32 to vector<128x1xf32>
    %45 = arith.mulf %40, %44 : vector<128x1xf32>
    %cst_15 = arith.constant 7.812500e-03 : f32
    %46 = vector.broadcast %cst_15 : f32 to vector<128x1xf32>
    %47 = arith.mulf %43, %46 : vector<128x1xf32>
    %48 = arith.mulf %45, %45 : vector<128x1xf32>
    %49 = arith.subf %47, %48 : vector<128x1xf32>
    %cst_16 = arith.constant 0.000000e+00 : f32
    %50 = vector.broadcast %cst_16 : f32 to vector<128x1xf32>
    %51 = arith.maximumf %49, %50 : vector<128x1xf32>
    %52 = vector.broadcast %45 : vector<128x1xf32> to vector<128x128xf32>
    %53 = arith.subf %38, %52 : vector<128x128xf32>
    %cst_17 = arith.constant 9.99999974E-6 : f32
    %54 = vector.broadcast %cst_17 : f32 to vector<128x1xf32>
    %55 = arith.addf %51, %54 : vector<128x1xf32>
    %56 = math.rsqrt %55 : vector<128x1xf32>
    %57 = vector.broadcast %56 : vector<128x1xf32> to vector<128x128xf32>
    %58 = arith.mulf %53, %57 : vector<128x128xf32>
    %59 = vector.broadcast %5 : vector<1x128xf32> to vector<128x128xf32>
    %60 = arith.mulf %58, %59 : vector<128x128xf32>
    %61 = vector.broadcast %6 : vector<1x128xf32> to vector<128x128xf32>
    %62 = arith.addf %60, %61 : vector<128x128xf32>
    %63 = arith.truncf %62 : vector<128x128xf32> to vector<128x128xbf16>
    %c0_18 = arith.constant 0 : index
    %c0_19 = arith.constant 0 : index
    %64 = vector.load %arg4[%c0_18, %c0_19] : memref<128x128xbf16, #tpu.memory_space<vmem>>, vector<128x128xbf16>
    %cst_20 = arith.constant dense<0.000000e+00> : vector<128x128xf32>
    %65 = tpu.matmul %63, %64, %cst_20 {dimension_numbers = #tpu.dot_dimension_numbers<[1], [0], [0], [1], [0, 0, 1, 1], [], []>} : vector<128x128xbf16>, vector<128x128xbf16>, vector<128x128xf32> -> vector<128x128xf32>
    %66 = vector.broadcast %7 : vector<1x128xf32> to vector<128x128xf32>
    %67 = arith.addf %65, %66 : vector<128x128xf32>
    %cst_21 = arith.constant dense<0xFF800000> : vector<128xf32>
    %68 = vector.multi_reduction <maximumf>, %67, %cst_21 [1] : vector<128x128xf32> to vector<128xf32>
    %69 = vector.shape_cast %68 : vector<128xf32> to vector<128x1xf32>
    %70 = vector.broadcast %69 : vector<128x1xf32> to vector<128x128xf32>
    %71 = arith.subf %67, %70 : vector<128x128xf32>
    %72 = math.exp %71 : vector<128x128xf32>
    %cst_22 = arith.constant dense<0.000000e+00> : vector<128xf32>
    %73 = vector.multi_reduction <add>, %72, %cst_22 [1] : vector<128x128xf32> to vector<128xf32>
    %74 = vector.shape_cast %73 : vector<128xf32> to vector<128x1xf32>
    %75 = math.log %74 : vector<128x1xf32>
    %76 = vector.broadcast %75 : vector<128x1xf32> to vector<128x128xf32>
    %77 = arith.subf %71, %76 : vector<128x128xf32>
    %c0_23 = arith.constant 0 : index
    %c0_24 = arith.constant 0 : index
    %78 = vector.load %arg5[%c0_23, %c0_24] : memref<128x128xf32, #tpu.memory_space<vmem>>, vector<128x128xf32>
    tpu.vector_store %arg5[%c0_23, %c0_24], %77 {strides = array<i32>} : memref<128x128xf32, #tpu.memory_space<vmem>>, vector<128x128xf32>,
    return
  }
  func.func @transform_0(%arg0: i32) -> (i32, i32) {
    %c0_i32 = arith.constant 0 : i32
    %c0_i32_0 = arith.constant 0 : i32
    return %arg0, %c0_i32 : i32, i32
  }
  func.func @transform_1(%arg0: i32) -> (i32, i32) {
    %c0_i32 = arith.constant 0 : i32
    %c0_i32_0 = arith.constant 0 : i32
    %c0_i32_1 = arith.constant 0 : i32
    return %c0_i32, %c0_i32_0 : i32, i32
  }
  func.func @transform_2(%arg0: i32) -> (i32, i32) {
    %c0_i32 = arith.constant 0 : i32
    %c0_i32_0 = arith.constant 0 : i32
    %c0_i32_1 = arith.constant 0 : i32
    return %c0_i32, %c0_i32_0 : i32, i32
  }
  func.func @transform_3(%arg0: i32) -> (i32, i32) {
    %c0_i32 = arith.constant 0 : i32
    %c0_i32_0 = arith.constant 0 : i32
    %c0_i32_1 = arith.constant 0 : i32
    return %c0_i32, %c0_i32_0 : i32, i32
  }
  func.func @transform_4(%arg0: i32) -> (i32, i32) {
    %c0_i32 = arith.constant 0 : i32
    %c0_i32_0 = arith.constant 0 : i32
    return %arg0, %c0_i32 : i32, i32
  }
}

module attributes {stable_mosaic.version = 11 : i64} {
  func.func @neuralnet_kernel(%arg0: i32, %arg1: memref<128x128xf32, #tpu.memory_space<vmem>>, %arg2: memref<8x128xf32, #tpu.memory_space<vmem>>, %arg3: memref<128x128xbf16, #tpu.memory_space<vmem>>, %arg4: memref<128x128xbf16, #tpu.memory_space<vmem>>, %arg5: memref<128x128xf32, #tpu.memory_space<vmem>>) attributes {dimension_semantics = [#tpu.dimension_semantics<parallel>], iteration_bounds = array<i64: 2>, scalar_prefetch = 0 : i64, scratch_operands = 0 : i64, tpu.core_type = #tpu.core_type<tc>, window_params = [{transform_indices = @transform_0, window_bounds = array<i64: 128, 128>}, {pipeline_mode = #tpu.pipeline_mode<synchronous>, transform_indices = @transform_1, window_bounds = array<i64: 8, 128>}, {pipeline_mode = #tpu.pipeline_mode<synchronous>, transform_indices = @transform_2, window_bounds = array<i64: 128, 128>}, {pipeline_mode = #tpu.pipeline_mode<synchronous>, transform_indices = @transform_3, window_bounds = array<i64: 128, 128>}, {transform_indices = @transform_4, window_bounds = array<i64: 128, 128>}]} {
    %c0 = arith.constant 0 : index
    %c0_0 = arith.constant 0 : index
    %0 = vector.load %arg1[%c0, %c0_0] : memref<128x128xf32, #tpu.memory_space<vmem>>, vector<128x128xf32>
    %c0_1 = arith.constant 0 : index
    %c0_2 = arith.constant 0 : index
    %1 = vector.load %arg2[%c0_1, %c0_2] : memref<8x128xf32, #tpu.memory_space<vmem>>, vector<8x128xf32>
    %2 = vector.extract_strided_slice %1 {offsets = [0, 0], sizes = [1, 128], strides = [1, 1]} : vector<8x128xf32> to vector<1x128xf32>
    %3 = vector.extract_strided_slice %1 {offsets = [1, 0], sizes = [1, 128], strides = [1, 1]} : vector<8x128xf32> to vector<1x128xf32>
    %4 = vector.extract_strided_slice %1 {offsets = [2, 0], sizes = [1, 128], strides = [1, 1]} : vector<8x128xf32> to vector<1x128xf32>
    %5 = vector.extract_strided_slice %1 {offsets = [3, 0], sizes = [1, 128], strides = [1, 1]} : vector<8x128xf32> to vector<1x128xf32>
    %6 = vector.extract_strided_slice %1 {offsets = [4, 0], sizes = [1, 128], strides = [1, 1]} : vector<8x128xf32> to vector<1x128xf32>
    %7 = vector.extract_strided_slice %1 {offsets = [5, 0], sizes = [1, 128], strides = [1, 1]} : vector<8x128xf32> to vector<1x128xf32>
    %cst = arith.constant dense<0.000000e+00> : vector<128xf32>
    %8 = vector.multi_reduction <add>, %0, %cst [1] : vector<128x128xf32> to vector<128xf32>
    %9 = vector.shape_cast %8 : vector<128xf32> to vector<128x1xf32>
    %10 = arith.mulf %0, %0 : vector<128x128xf32>
    %cst_3 = arith.constant dense<0.000000e+00> : vector<128xf32>
    %11 = vector.multi_reduction <add>, %10, %cst_3 [1] : vector<128x128xf32> to vector<128xf32>
    %12 = vector.shape_cast %11 : vector<128xf32> to vector<128x1xf32>
    %cst_4 = arith.constant 7.812500e-03 : f32
    %13 = vector.broadcast %cst_4 : f32 to vector<128x1xf32>
    %14 = arith.mulf %9, %13 : vector<128x1xf32>
    %cst_5 = arith.constant 7.812500e-03 : f32
    %15 = vector.broadcast %cst_5 : f32 to vector<128x1xf32>
    %16 = arith.mulf %12, %15 : vector<128x1xf32>
    %17 = arith.mulf %14, %14 : vector<128x1xf32>
    %18 = arith.subf %16, %17 : vector<128x1xf32>
    %cst_6 = arith.constant 0.000000e+00 : f32
    %19 = vector.broadcast %cst_6 : f32 to vector<128x1xf32>
    %20 = arith.maximumf %18, %19 : vector<128x1xf32>
    %21 = vector.broadcast %14 : vector<128x1xf32> to vector<128x128xf32>
    %22 = arith.subf %0, %21 : vector<128x128xf32>
    %cst_7 = arith.constant 9.99999974E-6 : f32
    %23 = vector.broadcast %cst_7 : f32 to vector<128x1xf32>
    %24 = arith.addf %20, %23 : vector<128x1xf32>
    %25 = math.rsqrt %24 : vector<128x1xf32>
    %26 = vector.broadcast %25 : vector<128x1xf32> to vector<128x128xf32>
    %27 = arith.mulf %22, %26 : vector<128x128xf32>
    %28 = vector.broadcast %2 : vector<1x128xf32> to vector<128x128xf32>
    %29 = arith.mulf %27, %28 : vector<128x128xf32>
    %30 = vector.broadcast %3 : vector<1x128xf32> to vector<128x128xf32>
    %31 = arith.addf %29, %30 : vector<128x128xf32>
    %32 = arith.truncf %31 : vector<128x128xf32> to vector<128x128xbf16>
    %c0_8 = arith.constant 0 : index
    %c0_9 = arith.constant 0 : index
    %33 = vector.load %arg3[%c0_8, %c0_9] : memref<128x128xbf16, #tpu.memory_space<vmem>>, vector<128x128xbf16>
    %cst_10 = arith.constant dense<0.000000e+00> : vector<128x128xf32>
    %34 = tpu.matmul %32, %33, %cst_10 {dimension_numbers = #tpu.dot_dimension_numbers<[1], [0], [0], [1], [0, 0, 1, 1], [], []>} : vector<128x128xbf16>, vector<128x128xbf16>, vector<128x128xf32> -> vector<128x128xf32>
    %35 = vector.broadcast %4 : vector<1x128xf32> to vector<128x128xf32>
    %36 = arith.addf %34, %35 : vector<128x128xf32>
    %cst_11 = arith.constant 0.000000e+00 : f32
    %37 = vector.broadcast %cst_11 : f32 to vector<128x128xf32>
    %38 = arith.maximumf %36, %37 : vector<128x128xf32>
    %cst_12 = arith.constant dense<0.000000e+00> : vector<128xf32>
    %39 = vector.multi_reduction <add>, %38, %cst_12 [1] : vector<128x128xf32> to vector<128xf32>
    %40 = vector.shape_cast %39 : vector<128xf32> to vector<128x1xf32>
    %41 = arith.mulf %38, %38 : vector<128x128xf32>
    %cst_13 = arith.constant dense<0.000000e+00> : vector<128xf32>
    %42 = vector.multi_reduction <add>, %41, %cst_13 [1] : vector<128x128xf32> to vector<128xf32>
    %43 = vector.shape_cast %42 : vector<128xf32> to vector<128x1xf32>
    %cst_14 = arith.constant 7.812500e-03 : f32
    %44 = vector.broadcast %cst_14 : f32 to vector<128x1xf32>
    %45 = arith.mulf %40, %44 : vector<128x1xf32>
    %cst_15 = arith.constant 7.812500e-03 : f32
    %46 = vector.broadcast %cst_15 : f32 to vector<128x1xf32>
    %47 = arith.mulf %43, %46 : vector<128x1xf32>
    %48 = arith.mulf %45, %45 : vector<128x1xf32>
    %49 = arith.subf %47, %48 : vector<128x1xf32>
    %cst_16 = arith.constant 0.000000e+00 : f32
    %50 = vector.broadcast %cst_16 : f32 to vector<128x1xf32>
    %51 = arith.maximumf %49, %50 : vector<128x1xf32>
    %52 = vector.broadcast %45 : vector<128x1xf32> to vector<128x128xf32>
    %53 = arith.subf %38, %52 : vector<128x128xf32>
    %cst_17 = arith.constant 9.99999974E-6 : f32
    %54 = vector.broadcast %cst_17 : f32 to vector<128x1xf32>
    %55 = arith.addf %51, %54 : vector<128x1xf32>
    %56 = math.rsqrt %55 : vector<128x1xf32>
    %57 = vector.broadcast %56 : vector<128x1xf32> to vector<128x128xf32>
    %58 = arith.mulf %53, %57 : vector<128x128xf32>
    %59 = vector.broadcast %5 : vector<1x128xf32> to vector<128x128xf32>
    %60 = arith.mulf %58, %59 : vector<128x128xf32>
    %61 = vector.broadcast %6 : vector<1x128xf32> to vector<128x128xf32>
    %62 = arith.addf %60, %61 : vector<128x128xf32>
    %63 = arith.truncf %62 : vector<128x128xf32> to vector<128x128xbf16>
    %c0_18 = arith.constant 0 : index
    %c0_19 = arith.constant 0 : index
    %64 = vector.load %arg4[%c0_18, %c0_19] : memref<128x128xbf16, #tpu.memory_space<vmem>>, vector<128x128xbf16>
    %cst_20 = arith.constant dense<0.000000e+00> : vector<128x128xf32>
    %65 = tpu.matmul %63, %64, %cst_20 {dimension_numbers = #tpu.dot_dimension_numbers<[1], [0], [0], [1], [0, 0, 1, 1], [], []>} : vector<128x128xbf16>, vector<128x128xbf16>, vector<128x128xf32> -> vector<128x128xf32>
    %66 = vector.broadcast %7 : vector<1x128xf32> to vector<128x128xf32>
    %67 = arith.addf %65, %66 : vector<128x128xf32>
    %cst_21 = arith.constant dense<0xFF800000> : vector<128xf32>
    %68 = vector.multi_reduction <maximumf>, %67, %cst_21 [1] : vector<128x128xf32> to vector<128xf32>
    %69 = vector.shape_cast %68 : vector<128xf32> to vector<128x1xf32>
    %70 = vector.broadcast %69 : vector<128x1xf32> to vector<128x128xf32>
    %71 = arith.subf %67, %70 : vector<128x128xf32>
    %72 = math.exp %71 : vector<128x128xf32>
    %cst_22 = arith.constant dense<0.000000e+00> : vector<128xf32>
    %73 = vector.multi_reduction <add>, %72, %cst_22 [1] : vector<128x128xf32> to vector<128xf32>
    %74 = vector.shape_cast %73 : vector<128xf32> to vector<128x1xf32>
    %75 = math.log %74 : vector<128x1xf32>
    %76 = vector.broadcast %75 : vector<128x1xf32> to vector<128x128xf32>
    %77 = arith.subf %71, %76 : vector<128x128xf32>
    %c0_23 = arith.constant 0 : index
    %c0_24 = arith.constant 0 : index
    %78 = vector.load %arg5[%c0_23, %c0_24] : memref<128x128xf32, #tpu.memory_space<vmem>>, vector<128x128xf32>
    tpu.vector_store %arg5[%c0_23, %c0_24], %77 {strides = array<i32>} : memref<128x128xf32, #tpu.memory_space<vmem>>, vector<128x128xf32>,
    return
  }
  func.func @transform_0(%arg0: i32) -> (i32, i32) {
    %c0_i32 = arith.constant 0 : i32
    %c0_i32_0 = arith.constant 0 : i32
    return %arg0, %c0_i32 : i32, i32
  }
  func.func @transform_1(%arg0: i32) -> (i32, i32) {
    %c0_i32 = arith.constant 0 : i32
    %c0_i32_0 = arith.constant 0 : i32
    %c0_i32_1 = arith.constant 0 : i32
    return %c0_i32, %c0_i32_0 : i32, i32
  }
  func.func @transform_2(%arg0: i32) -> (i32, i32) {
    %c0_i32 = arith.constant 0 : i32
    %c0_i32_0 = arith.constant 0 : i32
    %c0_i32_1 = arith.constant 0 : i32
    return %c0_i32, %c0_i32_0 : i32, i32
  }
  func.func @transform_3(%arg0: i32) -> (i32, i32) {
    %c0_i32 = arith.constant 0 : i32
    %c0_i32_0 = arith.constant 0 : i32
    %c0_i32_1 = arith.constant 0 : i32
    return %c0_i32, %c0_i32_0 : i32, i32
  }
  func.func @transform_4(%arg0: i32) -> (i32, i32) {
    %c0_i32 = arith.constant 0 : i32
    %c0_i32_0 = arith.constant 0 : i32
    return %arg0, %c0_i32 : i32, i32
  }
}

</mosaic_0001>

<llo_original>
// kernel: _neuralnet_forward.1
$region0: #{_neuralnet_forward.1}
  #allocation0 [shape = 'u32[]', space=smem, size = 0x4, offset = 0x4, fixed_abs, tag = 'smem constant byte address 0x4 - core index']
  #allocation1 [shape = 'u32[144,128]{1,0:T(1,128)}', space=vmem, size = 0x12000, scoped, tag = 'internal scratch']
  %s0 = inlined_call_operand.hbm [shape: f32[256,128], index: 0, kind: input, shape index: {}]
  %s1 = inlined_call_operand.hbm [shape: f32[8,128], index: 1, kind: input, shape index: {}]
  %s2 = inlined_call_operand.hbm [shape: bf16[128,128], index: 2, kind: input, shape index: {}]
  %s3 = inlined_call_operand.hbm [shape: bf16[128,128], index: 3, kind: input, shape index: {}]
  %s4 = inlined_call_operand.hbm [shape: f32[256,128], index: 4, kind: output, shape index: {}]
  %s5 = sld [smem:[#allocation0]]
  $region65: #{_neuralnet_forward.1} parent=0
    _
  %s7 = ssub.s32 1, %s5
  %s8 = scalar_select 0, %s7, %s5
  $region1: #{_neuralnet_forward.1} parent=0
    #allocation2 [shape = 'u8[131072]{0}', space=vmem, size = 0x20000, scoped, tag = 'input window, operand 0']
    #allocation3 [shape = 's32[2]{0}', space=sflag, size = 0x8, scoped, tag = 'scoped memory for _neuralnet_forward.1']
    #allocation4 [shape = 's32[2]{0}', space=sflag, size = 0x8, scoped, tag = 'scoped memory for _neuralnet_forward.1']
    #allocation5 [shape = 'u8[4096]{0}', space=vmem, size = 0x1000, scoped, tag = 'input window, operand 1, single buffered']
    #allocation6 [shape = 's32[1]{0}', space=sflag, size = 0x4, scoped, tag = 'scoped memory for _neuralnet_forward.1']
    #allocation7 [shape = 'u8[32768]{0}', space=vmem, size = 0x8000, scoped, tag = 'input window, operand 2, single buffered']
    #allocation8 [shape = 'u8[32768]{0}', space=vmem, size = 0x8000, scoped, tag = 'input window, operand 3, single buffered']
    #allocation9 [shape = 's32[1]{0}', space=sflag, size = 0x4, scoped, tag = 'scoped memory for _neuralnet_forward.1']
    #allocation10 [shape = 'u8[131072]{0}', space=vmem, size = 0x20000, scoped, tag = 'output window, operand 0']
    %9 = vsyncpa [#allocation3], 0
    %s10 = scalar_lea.sflag [#allocation3], 1
    %11 = vsyncpa %s10, 0
    %12 = vsyncpa [#allocation6], 0
    %13 = vsyncpa [#allocation9], 0
    %14 = vsyncpa [#allocation4], 0
    %s15 = scalar_lea.sflag [#allocation4], 1
    %16 = vsyncpa %s15, 0
    loop: start=0, step=1, limit=4
    $region2: #{_neuralnet_forward.1} parent=1 // loop_pre_header
      _
    $region3: #{_neuralnet_forward.1} parent=1 // loop_header
      %s18 = sphi 0, %s22
      %p19 = scmp.ge.s32.totalorder %s18, 4
      %s28 = sphi 0, %s30
      %s31 = sphi 0, %s28
      %s32 = sphi 0, %s31
      %s48 = sphi 0, %s32
      %s52 = sphi 0, %s52
      %s54 = sphi 0, %s52
      %s55 = sphi 0, %s54
      %s69 = sphi 0, %s55
      %s73 = sphi 0, %s73
      %s75 = sphi 0, %s73
      %s76 = sphi 0, %s75
      %s90 = sphi 0, %s76
      %s94 = sphi 0, %s94
      %s96 = sphi 0, %s94
      %s97 = sphi 0, %s96
      %s111 = sphi 0, %s97
      %s117 = sphi 0, %s119
      %s120 = sphi 0, %s117
      %s121 = sphi 0, %s120
      %s137 = sphi 0, %s121
    $region4: #{_neuralnet_forward.1} parent=1 // loop_header_branch
      %21 = sbr.rel (%p19) target = $region8
    $region5: #{_neuralnet_forward.1} parent=1 // loop_body
      %s23 = ssub.s32 %s18, 1
      %s24 = ssub.s32 %s18, 2
      %s25 = sadd.s32 %s18, 1
      %s26 = ssub.s32 %s18, %s25
      %p27 = scmp.eq.s32.totalorder %s26, 0
      %s29 = sadd.s32 %s28, 1
      %s30 = scalar_select %p27, %s28, %s29
      %p33 = pneg %p27
      %p34 = scmp.eq.s32.totalorder %s18, 1
      %p35 = por %p33, %p34
      %p36 = scmp.ne.s32.totalorder %s28, %s31
      %p37 = scmp.eq.s32.totalorder %s18, 0
      %p38 = por %p36, %p37
      %p39 = scmp.ne.s32.totalorder %s28, %s31
      %p40 = scmp.eq.s32.totalorder %s23, 1
      %p41 = por %p39, %p40
      %p42 = scmp.ne.s32.totalorder %s31, %s32
      %p43 = scmp.eq.s32.totalorder %s23, 0
      %p44 = por %p42, %p43
      %p45 = scmp.ne.s32.totalorder %s31, %s32
      %p46 = scmp.eq.s32.totalorder %s24, 1
      %p47 = por %p45, %p46
      %p49 = scmp.ne.s32.totalorder %s32, %s48
      %p50 = scmp.eq.s32.totalorder %s24, 0
      %p51 = por %p49, %p50
      %s53 = sadd.s32 %s52, 1
      %p56 = scmp.eq.s32.totalorder %s18, 1
      %p57 = scmp.ne.s32.totalorder %s52, %s54
      %p58 = scmp.eq.s32.totalorder %s18, 0
      %p59 = por %p57, %p58
      %p60 = scmp.ne.s32.totalorder %s52, %s54
      %p61 = scmp.eq.s32.totalorder %s23, 1
      %p62 = por %p60, %p61
      %p63 = scmp.ne.s32.totalorder %s54, %s55
      %p64 = scmp.eq.s32.totalorder %s23, 0
      %p65 = por %p63, %p64
      %p66 = scmp.ne.s32.totalorder %s54, %s55
      %p67 = scmp.eq.s32.totalorder %s24, 1
      %p68 = por %p66, %p67
      %p70 = scmp.ne.s32.totalorder %s55, %s69
      %p71 = scmp.eq.s32.totalorder %s24, 0
      %p72 = por %p70, %p71
      %s74 = sadd.s32 %s73, 1
      %p77 = scmp.eq.s32.totalorder %s18, 1
      %p78 = scmp.ne.s32.totalorder %s73, %s75
      %p79 = scmp.eq.s32.totalorder %s18, 0
      %p80 = por %p78, %p79
      %p81 = scmp.ne.s32.totalorder %s73, %s75
      %p82 = scmp.eq.s32.totalorder %s23, 1
      %p83 = por %p81, %p82
      %p84 = scmp.ne.s32.totalorder %s75, %s76
      %p85 = scmp.eq.s32.totalorder %s23, 0
      %p86 = por %p84, %p85
      %p87 = scmp.ne.s32.totalorder %s75, %s76
      %p88 = scmp.eq.s32.totalorder %s24, 1
      %p89 = por %p87, %p88
      %p91 = scmp.ne.s32.totalorder %s76, %s90
      %p92 = scmp.eq.s32.totalorder %s24, 0
      %p93 = por %p91, %p92
      %s95 = sadd.s32 %s94, 1
      %p98 = scmp.eq.s32.totalorder %s18, 1
      %p99 = scmp.ne.s32.totalorder %s94, %s96
      %p100 = scmp.eq.s32.totalorder %s18, 0
      %p101 = por %p99, %p100
      %p102 = scmp.ne.s32.totalorder %s94, %s96
      %p103 = scmp.eq.s32.totalorder %s23, 1
      %p104 = por %p102, %p103
      %p105 = scmp.ne.s32.totalorder %s96, %s97
      %p106 = scmp.eq.s32.totalorder %s23, 0
      %p107 = por %p105, %p106
      %p108 = scmp.ne.s32.totalorder %s96, %s97
      %p109 = scmp.eq.s32.totalorder %s24, 1
      %p110 = por %p108, %p109
      %p112 = scmp.ne.s32.totalorder %s97, %s111
      %p113 = scmp.eq.s32.totalorder %s24, 0
      %p114 = por %p112, %p113
      %s115 = ssub.s32 %s18, %s25
      %p116 = scmp.eq.s32.totalorder %s115, 0
      %s118 = sadd.s32 %s117, 1
      %s119 = scalar_select %p116, %s117, %s118
      %p122 = pneg %p116
      %p123 = scmp.eq.s32.totalorder %s18, 1
      %p124 = por %p122, %p123
      %p125 = scmp.ne.s32.totalorder %s117, %s120
      %p126 = scmp.eq.s32.totalorder %s18, 0
      %p127 = por %p125, %p126
      %p128 = scmp.ne.s32.totalorder %s117, %s120
      %p129 = scmp.eq.s32.totalorder %s23, 1
      %p130 = por %p128, %p129
      %p131 = scmp.ne.s32.totalorder %s120, %s121
      %p132 = scmp.eq.s32.totalorder %s23, 0
      %p133 = por %p131, %p132
      %p134 = scmp.ne.s32.totalorder %s120, %s121
      %p135 = scmp.eq.s32.totalorder %s24, 1
      %p136 = por %p134, %p135
      %p138 = scmp.ne.s32.totalorder %s121, %s137
      %p139 = scmp.eq.s32.totalorder %s24, 0
      %p140 = por %p138, %p139
      %p141 = scmp.le.s32.totalorder 1, %s18
      %p142 = scmp.lt.s32.totalorder %s18, 3
      %p143 = pnand %p141, %p142
      %p144 = pneg %p143
      // Predicated region
      $region9: #{_neuralnet_forward.1} parent=5 // pred_check
        _
      $region10: #{_neuralnet_forward.1} parent=5 // pred_check_branch
        %146 = sbr.rel (%p143) target = $region12
      $region11: #{_neuralnet_forward.1} parent=5 // pred_region
        %s147 = ssub.s32 %s18, 1
        // Predicated region
        $region13: #{_neuralnet_forward.1} parent=11 // pred_check
          %p148 = pneg %p65
        $region14: #{_neuralnet_forward.1} parent=11 // pred_check_branch
          %150 = sbr.rel (%p148) target = $region16
        $region15: #{_neuralnet_forward.1} parent=11 // pred_region
          %s152 = ssub.s32 128, 128
          %153 = vsyncadd [#allocation6], %s152
          %s155 = sshll.u32 [#allocation5], 4
          %s156 = int_to_ptr.vmem [resolvable:$true] %s155
          %158 = dma.hbm_to_vmem [thread:$0]  %s1, 128, %s156, [#allocation6]
        $region16: #{_neuralnet_forward.1} parent=11 // pred_fallthru
          _
        // Predicated region
        $region17: #{_neuralnet_forward.1} parent=11 // pred_check
          %p159 = pneg %p86
        $region18: #{_neuralnet_forward.1} parent=11 // pred_check_branch
          %161 = sbr.rel (%p159) target = $region20
        $region19: #{_neuralnet_forward.1} parent=11 // pred_region
          %s163 = ssub.s32 1024, 1024
          %164 = vsyncadd [#allocation6], %s163
          %s165 = sshll.u32 [#allocation7], 4
          %s166 = int_to_ptr.vmem [resolvable:$true] %s165
          %171 = dma.hbm_to_vmem [thread:$0]  %s2, 1024, %s166, [#allocation6], 64, 64, 4
        $region20: #{_neuralnet_forward.1} parent=11 // pred_fallthru
          _
        // Predicated region
        $region21: #{_neuralnet_forward.1} parent=11 // pred_check
          %p172 = pneg %p107
        $region22: #{_neuralnet_forward.1} parent=11 // pred_check_branch
          %174 = sbr.rel (%p172) target = $region24
        $region23: #{_neuralnet_forward.1} parent=11 // pred_region
          %s176 = ssub.s32 1024, 1024
          %177 = vsyncadd [#allocation9], %s176
          %s178 = sshll.u32 [#allocation8], 4
          %s179 = int_to_ptr.vmem [resolvable:$true] %s178
          %184 = dma.hbm_to_vmem [thread:$0]  %s3, 1024, %s179, [#allocation9], 64, 64, 4
        $region24: #{_neuralnet_forward.1} parent=11 // pred_fallthru
          _
      $region12: #{_neuralnet_forward.1} parent=5 // pred_fallthru
        _
      %p185 = scmp.lt.s32.totalorder %s18, 2
      // Predicated region
      $region25: #{_neuralnet_forward.1} parent=5 // pred_check
        %p186 = pneg %p185
      $region26: #{_neuralnet_forward.1} parent=5 // pred_check_branch
        %188 = sbr.rel (%p186) target = $region28
      $region27: #{_neuralnet_forward.1} parent=5 // pred_region
        // Predicated region
        $region29: #{_neuralnet_forward.1} parent=27 // pred_check
          %p189 = pneg %p38
        $region30: #{_neuralnet_forward.1} parent=27 // pred_check_branch
          %191 = sbr.rel (%p189) target = $region32
        $region31: #{_neuralnet_forward.1} parent=27 // pred_region
          %s192 = sand.u32 %s28, 1
          %s193 = scalar_lea.sflag [#allocation3], %s192
          %s194 = sand.u32 %s28, 1
          %s195 = smul.addr %s194, 128
          %s196 = scalar_lea.vmem [#allocation2], %s195
          %s197 = smul.u32 16, %s18
          %s199 = ssub.s32 2048, 2048
          %200 = vsyncadd %s193, %s199
          %s201 = smul.addr %s197, 128
          %s202 = scalar_lea.hbm %s0, %s201
          %s203 = sshll.u32 %s196, 4
          %s204 = int_to_ptr.vmem [resolvable:$true] %s203
          %209 = dma.hbm_to_vmem [thread:$0]  %s202, 2048, %s204, %s193, 128, 128, 8
        $region32: #{_neuralnet_forward.1} parent=27 // pred_fallthru
          _
      $region28: #{_neuralnet_forward.1} parent=5 // pred_fallthru
        _
      %p210 = scmp.le.s32.totalorder 1, %s18
      %p211 = scmp.lt.s32.totalorder %s18, 3
      %p212 = pnand %p210, %p211
      %p213 = pneg %p212
      // Predicated region
      $region33: #{_neuralnet_forward.1} parent=5 // pred_check
        _
      $region34: #{_neuralnet_forward.1} parent=5 // pred_check_branch
        %215 = sbr.rel (%p212) target = $region36
      $region35: #{_neuralnet_forward.1} parent=5 // pred_region
        %s216 = ssub.s32 %s18, 1
        %s217 = sand.u32 %s31, 1
        %s218 = scalar_lea.sflag [#allocation3], %s217
        %s219 = sand.u32 %s31, 1
        %s220 = smul.addr %s219, 128
        %s221 = scalar_lea.vmem [#allocation2], %s220
        // Predicated region
        $region37: #{_neuralnet_forward.1} parent=35 // pred_check
          %p222 = pneg %p44
        $region38: #{_neuralnet_forward.1} parent=35 // pred_check_branch
          %224 = sbr.rel (%p222) target = $region40
        $region39: #{_neuralnet_forward.1} parent=35 // pred_region
          %225 = dma.done %s218, 2048
        $region40: #{_neuralnet_forward.1} parent=35 // pred_fallthru
          _
        // Predicated region
        $region41: #{_neuralnet_forward.1} parent=35 // pred_check
          %p226 = pneg %p65
        $region42: #{_neuralnet_forward.1} parent=35 // pred_check_branch
          %228 = sbr.rel (%p226) target = $region44
        $region43: #{_neuralnet_forward.1} parent=35 // pred_region
          %229 = dma.done [#allocation6], 128
        $region44: #{_neuralnet_forward.1} parent=35 // pred_fallthru
          _
        // Predicated region
        $region45: #{_neuralnet_forward.1} parent=35 // pred_check
          %p230 = pneg %p86
        $region46: #{_neuralnet_forward.1} parent=35 // pred_check_branch
          %232 = sbr.rel (%p230) target = $region48
        $region47: #{_neuralnet_forward.1} parent=35 // pred_region
          %233 = dma.done [#allocation6], 1024
        $region48: #{_neuralnet_forward.1} parent=35 // pred_fallthru
          _
        // Predicated region
        $region49: #{_neuralnet_forward.1} parent=35 // pred_check
          %p234 = pneg %p107
        $region50: #{_neuralnet_forward.1} parent=35 // pred_check_branch
          %236 = sbr.rel (%p234) target = $region52
        $region51: #{_neuralnet_forward.1} parent=35 // pred_region
          %237 = dma.done [#allocation9], 1024
        $region52: #{_neuralnet_forward.1} parent=35 // pred_fallthru
          _
        %s238 = sand.u32 %s31, 1
        %s239 = scalar_lea.sflag [#allocation3], %s238
        %s240 = sand.u32 %s31, 1
        %s241 = smul.addr %s240, 128
        %s242 = scalar_lea.vmem [#allocation2], %s241
        %p243 = pneg %p44
        %p244 = pneg %p41
        %p245 = pneg %p65
        %p246 = pneg %p62
        %p247 = pneg %p86
        %p248 = pneg %p83
        %p249 = pneg %p107
        %p250 = pneg %p104
        %p251 = pneg %p133
        %p252 = pneg %p130
        %s253 = sand.u32 %s120, 1
        %s254 = scalar_lea.sflag [#allocation4], %s253
        %s255 = sand.u32 %s120, 1
        %s256 = smul.addr %s255, 128
        %s257 = scalar_lea.vmem [#allocation10], %s256
        %s258 = smul.u32 16, %s23
        %s259 = smul.u32 16, %s23
        %v261 = vld [vmem:[%s221] sm:$0xff]
        %v262 = vld [vmem:[%s221 + $0x8] sm:$0xff]
        %v263 = vld [vmem:[%s221 + $0x10] sm:$0xff]
        %v264 = vld [vmem:[%s221 + $0x18] sm:$0xff]
        %v265 = vld [vmem:[%s221 + $0x20] sm:$0xff]
        %v266 = vld [vmem:[%s221 + $0x28] sm:$0xff]
        %v267 = vld [vmem:[%s221 + $0x30] sm:$0xff]
        %v268 = vld [vmem:[%s221 + $0x38] sm:$0xff]
        %v269 = vld [vmem:[%s221 + $0x40] sm:$0xff]
        %v270 = vld [vmem:[%s221 + $0x48] sm:$0xff]
        %v271 = vld [vmem:[%s221 + $0x50] sm:$0xff]
        %v272 = vld [vmem:[%s221 + $0x58] sm:$0xff]
        %v273 = vld [vmem:[%s221 + $0x60] sm:$0xff]
        %v274 = vld [vmem:[%s221 + $0x68] sm:$0xff]
        %v275 = vld [vmem:[%s221 + $0x70] sm:$0xff]
        %v276 = vld [vmem:[%s221 + $0x78] sm:$0xff]
        %v277 = vld [vmem:[#allocation5] sm:$0xff]
        %278 = vadd.xlane.f32.xlu0 %v261
        %v279 = vpop.xlane.xlu0 %278
        %280 = vadd.xlane.f32.xlu0 %v262
        %v281 = vpop.xlane.xlu0 %280
        %282 = vadd.xlane.f32.xlu0 %v263
        %v283 = vpop.xlane.xlu0 %282
        %284 = vadd.xlane.f32.xlu0 %v264
        %v285 = vpop.xlane.xlu0 %284
        %286 = vadd.xlane.f32.xlu0 %v265
        %v287 = vpop.xlane.xlu0 %286
        %288 = vadd.xlane.f32.xlu0 %v266
        %v289 = vpop.xlane.xlu0 %288
        %290 = vadd.xlane.f32.xlu0 %v267
        %v291 = vpop.xlane.xlu0 %290
        %292 = vadd.xlane.f32.xlu0 %v268
        %v293 = vpop.xlane.xlu0 %292
        %294 = vadd.xlane.f32.xlu0 %v269
        %v295 = vpop.xlane.xlu0 %294
        %296 = vadd.xlane.f32.xlu0 %v270
        %v297 = vpop.xlane.xlu0 %296
        %298 = vadd.xlane.f32.xlu0 %v271
        %v299 = vpop.xlane.xlu0 %298
        %300 = vadd.xlane.f32.xlu0 %v272
        %v301 = vpop.xlane.xlu0 %300
        %302 = vadd.xlane.f32.xlu0 %v273
        %v303 = vpop.xlane.xlu0 %302
        %304 = vadd.xlane.f32.xlu0 %v274
        %v305 = vpop.xlane.xlu0 %304
        %306 = vadd.xlane.f32.xlu0 %v275
        %v307 = vpop.xlane.xlu0 %306
        %308 = vadd.xlane.f32.xlu0 %v276
        %v309 = vpop.xlane.xlu0 %308
        %v310 = vmul.f32 %v261, %v261
        %v311 = vmul.f32 %v262, %v262
        %v312 = vmul.f32 %v263, %v263
        %v313 = vmul.f32 %v264, %v264
        %v314 = vmul.f32 %v265, %v265
        %v315 = vmul.f32 %v266, %v266
        %v316 = vmul.f32 %v267, %v267
        %v317 = vmul.f32 %v268, %v268
        %v318 = vmul.f32 %v269, %v269
        %v319 = vmul.f32 %v270, %v270
        %v320 = vmul.f32 %v271, %v271
        %v321 = vmul.f32 %v272, %v272
        %v322 = vmul.f32 %v273, %v273
        %v323 = vmul.f32 %v274, %v274
        %v324 = vmul.f32 %v275, %v275
        %v325 = vmul.f32 %v276, %v276
        %326 = vadd.xlane.f32.xlu0 %v310
        %v327 = vpop.xlane.xlu0 %326
        %328 = vadd.xlane.f32.xlu0 %v311
        %v329 = vpop.xlane.xlu0 %328
        %330 = vadd.xlane.f32.xlu0 %v312
        %v331 = vpop.xlane.xlu0 %330
        %332 = vadd.xlane.f32.xlu0 %v313
        %v333 = vpop.xlane.xlu0 %332
        %334 = vadd.xlane.f32.xlu0 %v314
        %v335 = vpop.xlane.xlu0 %334
        %336 = vadd.xlane.f32.xlu0 %v315
        %v337 = vpop.xlane.xlu0 %336
        %338 = vadd.xlane.f32.xlu0 %v316
        %v339 = vpop.xlane.xlu0 %338
        %340 = vadd.xlane.f32.xlu0 %v317
        %v341 = vpop.xlane.xlu0 %340
        %342 = vadd.xlane.f32.xlu0 %v318
        %v343 = vpop.xlane.xlu0 %342
        %344 = vadd.xlane.f32.xlu0 %v319
        %v345 = vpop.xlane.xlu0 %344
        %346 = vadd.xlane.f32.xlu0 %v320
        %v347 = vpop.xlane.xlu0 %346
        %348 = vadd.xlane.f32.xlu0 %v321
        %v349 = vpop.xlane.xlu0 %348
        %350 = vadd.xlane.f32.xlu0 %v322
        %v351 = vpop.xlane.xlu0 %350
        %352 = vadd.xlane.f32.xlu0 %v323
        %v353 = vpop.xlane.xlu0 %352
        %354 = vadd.xlane.f32.xlu0 %v324
        %v355 = vpop.xlane.xlu0 %354
        %356 = vadd.xlane.f32.xlu0 %v325
        %v357 = vpop.xlane.xlu0 %356
        %v358 = vmul.f32 %v279, 0.0078125
        %v359 = vmul.f32 %v281, 0.0078125
        %v360 = vmul.f32 %v283, 0.0078125
        %v361 = vmul.f32 %v285, 0.0078125
        %v362 = vmul.f32 %v287, 0.0078125
        %v363 = vmul.f32 %v289, 0.0078125
        %v364 = vmul.f32 %v291, 0.0078125
        %v365 = vmul.f32 %v293, 0.0078125
        %v366 = vmul.f32 %v295, 0.0078125
        %v367 = vmul.f32 %v297, 0.0078125
        %v368 = vmul.f32 %v299, 0.0078125
        %v369 = vmul.f32 %v301, 0.0078125
        %v370 = vmul.f32 %v303, 0.0078125
        %v371 = vmul.f32 %v305, 0.0078125
        %v372 = vmul.f32 %v307, 0.0078125
        %v373 = vmul.f32 %v309, 0.0078125
        %v374 = vmul.f32 %v327, 0.0078125
        %v375 = vmul.f32 %v329, 0.0078125
        %v376 = vmul.f32 %v331, 0.0078125
        %v377 = vmul.f32 %v333, 0.0078125
        %v378 = vmul.f32 %v335, 0.0078125
        %v379 = vmul.f32 %v337, 0.0078125
        %v380 = vmul.f32 %v339, 0.0078125
        %v381 = vmul.f32 %v341, 0.0078125
        %v382 = vmul.f32 %v343, 0.0078125
        %v383 = vmul.f32 %v345, 0.0078125
        %v384 = vmul.f32 %v347, 0.0078125
        %v385 = vmul.f32 %v349, 0.0078125
        %v386 = vmul.f32 %v351, 0.0078125
        %v387 = vmul.f32 %v353, 0.0078125
        %v388 = vmul.f32 %v355, 0.0078125
        %v389 = vmul.f32 %v357, 0.0078125
        %v390 = vmul.f32 %v358, %v358
        %v391 = vmul.f32 %v359, %v359
        %v392 = vmul.f32 %v360, %v360
        %v393 = vmul.f32 %v361, %v361
        %v394 = vmul.f32 %v362, %v362
        %v395 = vmul.f32 %v363, %v363
        %v396 = vmul.f32 %v364, %v364
        %v397 = vmul.f32 %v365, %v365
        %v398 = vmul.f32 %v366, %v366
        %v399 = vmul.f32 %v367, %v367
        %v400 = vmul.f32 %v368, %v368
        %v401 = vmul.f32 %v369, %v369
        %v402 = vmul.f32 %v370, %v370
        %v403 = vmul.f32 %v371, %v371
        %v404 = vmul.f32 %v372, %v372
        %v405 = vmul.f32 %v373, %v373
        %v406 = vsub.f32 %v374, %v390
        %v407 = vsub.f32 %v375, %v391
        %v408 = vsub.f32 %v376, %v392
        %v409 = vsub.f32 %v377, %v393
        %v410 = vsub.f32 %v378, %v394
        %v411 = vsub.f32 %v379, %v395
        %v412 = vsub.f32 %v380, %v396
        %v413 = vsub.f32 %v381, %v397
        %v414 = vsub.f32 %v382, %v398
        %v415 = vsub.f32 %v383, %v399
        %v416 = vsub.f32 %v384, %v400
        %v417 = vsub.f32 %v385, %v401
        %v418 = vsub.f32 %v386, %v402
        %v419 = vsub.f32 %v387, %v403
        %v420 = vsub.f32 %v388, %v404
        %v421 = vsub.f32 %v389, %v405
        %v422 = vmax.f32 %v406, 0.0
        %v423 = vmax.f32 %v407, 0.0
        %v424 = vmax.f32 %v408, 0.0
        %v425 = vmax.f32 %v409, 0.0
        %v426 = vmax.f32 %v410, 0.0
        %v427 = vmax.f32 %v411, 0.0
        %v428 = vmax.f32 %v412, 0.0
        %v429 = vmax.f32 %v413, 0.0
        %v430 = vmax.f32 %v414, 0.0
        %v431 = vmax.f32 %v415, 0.0
        %v432 = vmax.f32 %v416, 0.0
        %v433 = vmax.f32 %v417, 0.0
        %v434 = vmax.f32 %v418, 0.0
        %v435 = vmax.f32 %v419, 0.0
        %v436 = vmax.f32 %v420, 0.0
        %v437 = vmax.f32 %v421, 0.0
        %v438 = vsub.f32 %v261, %v358
        %v439 = vsub.f32 %v262, %v359
        %v440 = vsub.f32 %v263, %v360
        %v441 = vsub.f32 %v264, %v361
        %v442 = vsub.f32 %v265, %v362
        %v443 = vsub.f32 %v266, %v363
        %v444 = vsub.f32 %v267, %v364
        %v445 = vsub.f32 %v268, %v365
        %v446 = vsub.f32 %v269, %v366
        %v447 = vsub.f32 %v270, %v367
        %v448 = vsub.f32 %v271, %v368
        %v449 = vsub.f32 %v272, %v369
        %v450 = vsub.f32 %v273, %v370
        %v451 = vsub.f32 %v274, %v371
        %v452 = vsub.f32 %v275, %v372
        %v453 = vsub.f32 %v276, %v373
        %v454 = vadd.f32 %v422, 1e-05
        %v455 = vadd.f32 %v423, 1e-05
        %v456 = vadd.f32 %v424, 1e-05
        %v457 = vadd.f32 %v425, 1e-05
        %v458 = vadd.f32 %v426, 1e-05
        %v459 = vadd.f32 %v427, 1e-05
        %v460 = vadd.f32 %v428, 1e-05
        %v461 = vadd.f32 %v429, 1e-05
        %v462 = vadd.f32 %v430, 1e-05
        %v463 = vadd.f32 %v431, 1e-05
        %v464 = vadd.f32 %v432, 1e-05
        %v465 = vadd.f32 %v433, 1e-05
        %v466 = vadd.f32 %v434, 1e-05
        %v467 = vadd.f32 %v435, 1e-05
        %v468 = vadd.f32 %v436, 1e-05
        %v469 = vadd.f32 %v437, 1e-05
        %v470 = vrsqrt.pop %v454
        %v471 = vrsqrt.pop %v455
        %v472 = vrsqrt.pop %v456
        %v473 = vrsqrt.pop %v457
        %v474 = vrsqrt.pop %v458
        %v475 = vrsqrt.pop %v459
        %v476 = vrsqrt.pop %v460
        %v477 = vrsqrt.pop %v461
        %v478 = vrsqrt.pop %v462
        %v479 = vrsqrt.pop %v463
        %v480 = vrsqrt.pop %v464
        %v481 = vrsqrt.pop %v465
        %v482 = vrsqrt.pop %v466
        %v483 = vrsqrt.pop %v467
        %v484 = vrsqrt.pop %v468
        %v485 = vrsqrt.pop %v469
        %v486 = vmul.f32 %v438, %v470
        %v487 = vmul.f32 %v439, %v471
        %v488 = vmul.f32 %v440, %v472
        %v489 = vmul.f32 %v441, %v473
        %v490 = vmul.f32 %v442, %v474
        %v491 = vmul.f32 %v443, %v475
        %v492 = vmul.f32 %v444, %v476
        %v493 = vmul.f32 %v445, %v477
        %v494 = vmul.f32 %v446, %v478
        %v495 = vmul.f32 %v447, %v479
        %v496 = vmul.f32 %v448, %v480
        %v497 = vmul.f32 %v449, %v481
        %v498 = vmul.f32 %v450, %v482
        %v499 = vmul.f32 %v451, %v483
        %v500 = vmul.f32 %v452, %v484
        %v501 = vmul.f32 %v453, %v485
        %v502 = vlaneseq
        %v503 = vshrl.u32 %v502, 7
        %v504 = vsub.s32 0, %v503
        %v505 = vrot.slane %v277, %v504
        %v506 = vmul.f32 %v486, %v505
        %v507 = vmul.f32 %v487, %v505
        %v508 = vmul.f32 %v488, %v505
        %v509 = vmul.f32 %v489, %v505
        %v510 = vmul.f32 %v490, %v505
        %v511 = vmul.f32 %v491, %v505
        %v512 = vmul.f32 %v492, %v505
        %v513 = vmul.f32 %v493, %v505
        %v514 = vmul.f32 %v494, %v505
        %v515 = vmul.f32 %v495, %v505
        %v516 = vmul.f32 %v496, %v505
        %v517 = vmul.f32 %v497, %v505
        %v518 = vmul.f32 %v498, %v505
        %v519 = vmul.f32 %v499, %v505
        %v520 = vmul.f32 %v500, %v505
        %v521 = vmul.f32 %v501, %v505
        %v522 = vlaneseq
        %v523 = vshrl.u32 %v522, 7
        %v524 = vsub.s32 1, %v523
        %v525 = vrot.slane %v277, %v524
        %v526 = vadd.f32 %v506, %v525
        %v527 = vadd.f32 %v507, %v525
        %v528 = vadd.f32 %v508, %v525
        %v529 = vadd.f32 %v509, %v525
        %v530 = vadd.f32 %v510, %v525
        %v531 = vadd.f32 %v511, %v525
        %v532 = vadd.f32 %v512, %v525
        %v533 = vadd.f32 %v513, %v525
        %v534 = vadd.f32 %v514, %v525
        %v535 = vadd.f32 %v515, %v525
        %v536 = vadd.f32 %v516, %v525
        %v537 = vadd.f32 %v517, %v525
        %v538 = vadd.f32 %v518, %v525
        %v539 = vadd.f32 %v519, %v525
        %v540 = vadd.f32 %v520, %v525
        %v541 = vadd.f32 %v521, %v525
        %v542 = vpack.c.bf16 %v527, %v526
        %v543 = vpack.c.bf16 %v529, %v528
        %v544 = vpack.c.bf16 %v531, %v530
        %v545 = vpack.c.bf16 %v533, %v532
        %v546 = vpack.c.bf16 %v535, %v534
        %v547 = vpack.c.bf16 %v537, %v536
        %v548 = vpack.c.bf16 %v539, %v538
        %v549 = vpack.c.bf16 %v541, %v540
        %v550 = vld [vmem:[#allocation7] sm:$0xf]
        %v551 = vld [vmem:[#allocation7 + $0x4] sm:$0xf]
        %v552 = vld [vmem:[#allocation7 + $0x8] sm:$0xf]
        %v553 = vld [vmem:[#allocation7 + $0xc] sm:$0xf]
        %v554 = vld [vmem:[#allocation7 + $0x10] sm:$0xf]
        %v555 = vld [vmem:[#allocation7 + $0x14] sm:$0xf]
        %v556 = vld [vmem:[#allocation7 + $0x18] sm:$0xf]
        %v557 = vld [vmem:[#allocation7 + $0x1c] sm:$0xf]
        %v558 = vld [vmem:[#allocation7 + $0x20] sm:$0xf]
        %v559 = vld [vmem:[#allocation7 + $0x24] sm:$0xf]
        %v560 = vld [vmem:[#allocation7 + $0x28] sm:$0xf]
        %v561 = vld [vmem:[#allocation7 + $0x2c] sm:$0xf]
        %v562 = vld [vmem:[#allocation7 + $0x30] sm:$0xf]
        %v563 = vld [vmem:[#allocation7 + $0x34] sm:$0xf]
        %v564 = vld [vmem:[#allocation7 + $0x38] sm:$0xf]
        %v565 = vld [vmem:[#allocation7 + $0x3c] sm:$0xf]
        %v566 = vlaneseq
        %v567 = vshrl.u32 %v566, 7
        %v568 = vsub.s32 2, %v567
        %v569 = vrot.slane %v277, %v568
        %v586 = vunpack.c.l.b16 %v550
        %v587 = vunpack.c.l.b16 %v551
        %v588 = vunpack.c.l.b16 %v552
        %v589 = vunpack.c.l.b16 %v553
        %v590 = vunpack.c.l.b16 %v554
        %v591 = vunpack.c.l.b16 %v555
        %v592 = vunpack.c.l.b16 %v556
        %v593 = vunpack.c.l.b16 %v557
        %v594 = vunpack.c.l.b16 %v558
        %v595 = vunpack.c.l.b16 %v559
        %v596 = vunpack.c.l.b16 %v560
        %v597 = vunpack.c.l.b16 %v561
        %v598 = vunpack.c.l.b16 %v562
        %v599 = vunpack.c.l.b16 %v563
        %v600 = vunpack.c.l.b16 %v564
        %v601 = vunpack.c.l.b16 %v565
        %v602 = vpack.c.b16 %v587, %v586
        %v603 = vpack.c.b16 %v589, %v588
        %v604 = vpack.c.b16 %v591, %v590
        %v605 = vpack.c.b16 %v593, %v592
        %v606 = vpack.c.b16 %v595, %v594
        %v607 = vpack.c.b16 %v597, %v596
        %v608 = vpack.c.b16 %v599, %v598
        %v609 = vpack.c.b16 %v601, %v600
        %618 = vmatprep.subr.bf16.mxu0 0
        %619 = vmatpush1.bf16.msra.mxu0 %v602
        %620 = vmatprep.subr.bf16.mxu0 0
        %621 = vmatpush1.bf16.msra.mxu0 %v603
        %622 = vmatprep.subr.bf16.mxu0 0
        %623 = vmatpush1.bf16.msra.mxu0 %v604
        %624 = vmatprep.subr.bf16.mxu0 0
        %625 = vmatpush1.bf16.msra.mxu0 %v605
        %626 = vmatprep.subr.bf16.mxu0 0
        %627 = vmatpush1.bf16.msra.mxu0 %v606
        %628 = vmatprep.subr.bf16.mxu0 0
        %629 = vmatpush1.bf16.msra.mxu0 %v607
        %630 = vmatprep.subr.bf16.mxu0 0
        %631 = vmatpush1.bf16.msra.mxu0 %v608
        %632 = vmatprep.subr.bf16.mxu0 0
        %633 = vmatpush1.bf16.msra.mxu0 %v609
        %634 = vmatprep.subr.bf16.mxu0 0
        %635 = vmatpush1.bf16.msra.mxu0 0
        %636 = vmatprep.subr.bf16.mxu0 0
        %637 = vmatpush1.bf16.msra.mxu0 0
        %638 = vmatprep.subr.bf16.mxu0 0
        %639 = vmatpush1.bf16.msra.mxu0 0
        %640 = vmatprep.subr.bf16.mxu0 0
        %641 = vmatpush1.bf16.msra.mxu0 0
        %642 = vmatprep.subr.bf16.mxu0 0
        %643 = vmatpush1.bf16.msra.mxu0 0
        %644 = vmatprep.subr.bf16.mxu0 0
        %645 = vmatpush1.bf16.msra.mxu0 0
        %646 = vmatprep.subr.bf16.mxu0 0
        %647 = vmatpush1.bf16.msra.mxu0 0
        %648 = vmatprep.subr.bf16.mxu0 0
        %649 = vmatpush1.bf16.msra.mxu0 0
        %650 = vmatprep.mubr.bf16.mxu0 0
        %651 = vmatmul.mubr.bf16.gmra.mrb[0].mxu0 %v542
        %v652 = vpop.f32.mrb[0].mxu0
        %v653 = vadd.f32 %v569, %v652
        %v654 = vpop.f32.mrb[0].mxu0
        %v655 = vpop.f32.mrb[0].mxu0
        %v656 = vadd.f32 %v569, %v655
        %v657 = vpop.f32.mrb[0].mxu0
        %658 = vmatprep.mubr.bf16.mxu0 0
        %659 = vmatmul.mubr.bf16.gmra.mrb[0].mxu0 %v543
        %v660 = vpop.f32.mrb[0].mxu0
        %v661 = vadd.f32 %v569, %v660
        %v662 = vpop.f32.mrb[0].mxu0
        %v663 = vpop.f32.mrb[0].mxu0
        %v664 = vadd.f32 %v569, %v663
        %v665 = vpop.f32.mrb[0].mxu0
        %666 = vmatprep.mubr.bf16.mxu0 0
        %667 = vmatmul.mubr.bf16.gmra.mrb[0].mxu0 %v544
        %v668 = vpop.f32.mrb[0].mxu0
        %v669 = vadd.f32 %v569, %v668
        %v670 = vpop.f32.mrb[0].mxu0
        %v671 = vpop.f32.mrb[0].mxu0
        %v672 = vadd.f32 %v569, %v671
        %v673 = vpop.f32.mrb[0].mxu0
        %674 = vmatprep.mubr.bf16.mxu0 0
        %675 = vmatmul.mubr.bf16.gmra.mrb[0].mxu0 %v545
        %v676 = vpop.f32.mrb[0].mxu0
        %v677 = vadd.f32 %v569, %v676
        %v678 = vpop.f32.mrb[0].mxu0
        %v679 = vpop.f32.mrb[0].mxu0
        %v680 = vadd.f32 %v569, %v679
        %v681 = vpop.f32.mrb[0].mxu0
        %682 = vmatprep.mubr.bf16.mxu0 0
        %683 = vmatmul.mubr.bf16.gmra.mrb[0].mxu0 %v546
        %v684 = vpop.f32.mrb[0].mxu0
        %v685 = vadd.f32 %v569, %v684
        %v686 = vpop.f32.mrb[0].mxu0
        %v687 = vpop.f32.mrb[0].mxu0
        %v688 = vadd.f32 %v569, %v687
        %v689 = vpop.f32.mrb[0].mxu0
        %690 = vmatprep.mubr.bf16.mxu0 0
        %691 = vmatmul.mubr.bf16.gmra.mrb[0].mxu0 %v547
        %v692 = vpop.f32.mrb[0].mxu0
        %v693 = vadd.f32 %v569, %v692
        %v694 = vpop.f32.mrb[0].mxu0
        %v695 = vpop.f32.mrb[0].mxu0
        %v696 = vadd.f32 %v569, %v695
        %v697 = vpop.f32.mrb[0].mxu0
        %698 = vmatprep.mubr.bf16.mxu0 0
        %699 = vmatmul.mubr.bf16.gmra.mrb[0].mxu0 %v548
        %v700 = vpop.f32.mrb[0].mxu0
        %v701 = vadd.f32 %v569, %v700
        %v702 = vpop.f32.mrb[0].mxu0
        %v703 = vpop.f32.mrb[0].mxu0
        %v704 = vadd.f32 %v569, %v703
        %v705 = vpop.f32.mrb[0].mxu0
        %706 = vmatprep.mubr.bf16.mxu0 0
        %707 = vmatmul.mubr.bf16.gmra.mrb[0].mxu0 %v549
        %v708 = vpop.f32.mrb[0].mxu0
        %v709 = vadd.f32 %v569, %v708
        %v710 = vpop.f32.mrb[0].mxu0
        %v711 = vpop.f32.mrb[0].mxu0
        %v712 = vadd.f32 %v569, %v711
        %v713 = vpop.f32.mrb[0].mxu0
        %714 = vdwg.mxu0
        %v715 = vmax.f32 %v653, 0.0
        %v716 = vmax.f32 %v656, 0.0
        %v717 = vmax.f32 %v661, 0.0
        %v718 = vmax.f32 %v664, 0.0
        %v719 = vmax.f32 %v669, 0.0
        %v720 = vmax.f32 %v672, 0.0
        %v721 = vmax.f32 %v677, 0.0
        %v722 = vmax.f32 %v680, 0.0
        %v723 = vmax.f32 %v685, 0.0
        %v724 = vmax.f32 %v688, 0.0
        %v725 = vmax.f32 %v693, 0.0
        %v726 = vmax.f32 %v696, 0.0
        %v727 = vmax.f32 %v701, 0.0
        %v728 = vmax.f32 %v704, 0.0
        %v729 = vmax.f32 %v709, 0.0
        %v730 = vmax.f32 %v712, 0.0
        %731 = vadd.xlane.f32.xlu0 %v715
        %v732 = vpop.xlane.xlu0 %731
        %733 = vadd.xlane.f32.xlu0 %v716
        %v734 = vpop.xlane.xlu0 %733
        %735 = vadd.xlane.f32.xlu0 %v717
        %v736 = vpop.xlane.xlu0 %735
        %737 = vadd.xlane.f32.xlu0 %v718
        %v738 = vpop.xlane.xlu0 %737
        %739 = vadd.xlane.f32.xlu0 %v719
        %v740 = vpop.xlane.xlu0 %739
        %741 = vadd.xlane.f32.xlu0 %v720
        %v742 = vpop.xlane.xlu0 %741
        %743 = vadd.xlane.f32.xlu0 %v721
        %v744 = vpop.xlane.xlu0 %743
        %745 = vadd.xlane.f32.xlu0 %v722
        %v746 = vpop.xlane.xlu0 %745
        %747 = vadd.xlane.f32.xlu0 %v723
        %v748 = vpop.xlane.xlu0 %747
        %749 = vadd.xlane.f32.xlu0 %v724
        %v750 = vpop.xlane.xlu0 %749
        %751 = vadd.xlane.f32.xlu0 %v725
        %v752 = vpop.xlane.xlu0 %751
        %753 = vadd.xlane.f32.xlu0 %v726
        %v754 = vpop.xlane.xlu0 %753
        %755 = vadd.xlane.f32.xlu0 %v727
        %v756 = vpop.xlane.xlu0 %755
        %757 = vadd.xlane.f32.xlu0 %v728
        %v758 = vpop.xlane.xlu0 %757
        %759 = vadd.xlane.f32.xlu0 %v729
        %v760 = vpop.xlane.xlu0 %759
        %761 = vadd.xlane.f32.xlu0 %v730
        %v762 = vpop.xlane.xlu0 %761
        %v763 = vmul.f32 %v715, %v715
        %v764 = vmul.f32 %v716, %v716
        %v765 = vmul.f32 %v717, %v717
        %v766 = vmul.f32 %v718, %v718
        %v767 = vmul.f32 %v719, %v719
        %v768 = vmul.f32 %v720, %v720
        %v769 = vmul.f32 %v721, %v721
        %v770 = vmul.f32 %v722, %v722
        %v771 = vmul.f32 %v723, %v723
        %v772 = vmul.f32 %v724, %v724
        %v773 = vmul.f32 %v725, %v725
        %v774 = vmul.f32 %v726, %v726
        %v775 = vmul.f32 %v727, %v727
        %v776 = vmul.f32 %v728, %v728
        %v777 = vmul.f32 %v729, %v729
        %v778 = vmul.f32 %v730, %v730
        %779 = vadd.xlane.f32.xlu0 %v763
        %v780 = vpop.xlane.xlu0 %779
        %781 = vadd.xlane.f32.xlu0 %v764
        %v782 = vpop.xlane.xlu0 %781
        %783 = vadd.xlane.f32.xlu0 %v765
        %v784 = vpop.xlane.xlu0 %783
        %785 = vadd.xlane.f32.xlu0 %v766
        %v786 = vpop.xlane.xlu0 %785
        %787 = vadd.xlane.f32.xlu0 %v767
        %v788 = vpop.xlane.xlu0 %787
        %789 = vadd.xlane.f32.xlu0 %v768
        %v790 = vpop.xlane.xlu0 %789
        %791 = vadd.xlane.f32.xlu0 %v769
        %v792 = vpop.xlane.xlu0 %791
        %793 = vadd.xlane.f32.xlu0 %v770
        %v794 = vpop.xlane.xlu0 %793
        %795 = vadd.xlane.f32.xlu0 %v771
        %v796 = vpop.xlane.xlu0 %795
        %797 = vadd.xlane.f32.xlu0 %v772
        %v798 = vpop.xlane.xlu0 %797
        %799 = vadd.xlane.f32.xlu0 %v773
        %v800 = vpop.xlane.xlu0 %799
        %801 = vadd.xlane.f32.xlu0 %v774
        %v802 = vpop.xlane.xlu0 %801
        %803 = vadd.xlane.f32.xlu0 %v775
        %v804 = vpop.xlane.xlu0 %803
        %805 = vadd.xlane.f32.xlu0 %v776
        %v806 = vpop.xlane.xlu0 %805
        %807 = vadd.xlane.f32.xlu0 %v777
        %v808 = vpop.xlane.xlu0 %807
        %809 = vadd.xlane.f32.xlu0 %v778
        %v810 = vpop.xlane.xlu0 %809
        %v811 = vmul.f32 %v732, 0.0078125
        %v812 = vmul.f32 %v734, 0.0078125
        %v813 = vmul.f32 %v736, 0.0078125
        %v814 = vmul.f32 %v738, 0.0078125
        %v815 = vmul.f32 %v740, 0.0078125
        %v816 = vmul.f32 %v742, 0.0078125
        %v817 = vmul.f32 %v744, 0.0078125
        %v818 = vmul.f32 %v746, 0.0078125
        %v819 = vmul.f32 %v748, 0.0078125
        %v820 = vmul.f32 %v750, 0.0078125
        %v821 = vmul.f32 %v752, 0.0078125
        %v822 = vmul.f32 %v754, 0.0078125
        %v823 = vmul.f32 %v756, 0.0078125
        %v824 = vmul.f32 %v758, 0.0078125
        %v825 = vmul.f32 %v760, 0.0078125
        %v826 = vmul.f32 %v762, 0.0078125
        %v827 = vmul.f32 %v780, 0.0078125
        %v828 = vmul.f32 %v782, 0.0078125
        %v829 = vmul.f32 %v784, 0.0078125
        %v830 = vmul.f32 %v786, 0.0078125
        %v831 = vmul.f32 %v788, 0.0078125
        %v832 = vmul.f32 %v790, 0.0078125
        %v833 = vmul.f32 %v792, 0.0078125
        %v834 = vmul.f32 %v794, 0.0078125
        %v835 = vmul.f32 %v796, 0.0078125
        %v836 = vmul.f32 %v798, 0.0078125
        %v837 = vmul.f32 %v800, 0.0078125
        %v838 = vmul.f32 %v802, 0.0078125
        %v839 = vmul.f32 %v804, 0.0078125
        %v840 = vmul.f32 %v806, 0.0078125
        %v841 = vmul.f32 %v808, 0.0078125
        %v842 = vmul.f32 %v810, 0.0078125
        %v843 = vmul.f32 %v811, %v811
        %v844 = vmul.f32 %v812, %v812
        %v845 = vmul.f32 %v813, %v813
        %v846 = vmul.f32 %v814, %v814
        %v847 = vmul.f32 %v815, %v815
        %v848 = vmul.f32 %v816, %v816
        %v849 = vmul.f32 %v817, %v817
        %v850 = vmul.f32 %v818, %v818
        %v851 = vmul.f32 %v819, %v819
        %v852 = vmul.f32 %v820, %v820
        %v853 = vmul.f32 %v821, %v821
        %v854 = vmul.f32 %v822, %v822
        %v855 = vmul.f32 %v823, %v823
        %v856 = vmul.f32 %v824, %v824
        %v857 = vmul.f32 %v825, %v825
        %v858 = vmul.f32 %v826, %v826
        %v859 = vsub.f32 %v827, %v843
        %v860 = vsub.f32 %v828, %v844
        %v861 = vsub.f32 %v829, %v845
        %v862 = vsub.f32 %v830, %v846
        %v863 = vsub.f32 %v831, %v847
        %v864 = vsub.f32 %v832, %v848
        %v865 = vsub.f32 %v833, %v849
        %v866 = vsub.f32 %v834, %v850
        %v867 = vsub.f32 %v835, %v851
        %v868 = vsub.f32 %v836, %v852
        %v869 = vsub.f32 %v837, %v853
        %v870 = vsub.f32 %v838, %v854
        %v871 = vsub.f32 %v839, %v855
        %v872 = vsub.f32 %v840, %v856
        %v873 = vsub.f32 %v841, %v857
        %v874 = vsub.f32 %v842, %v858
        %v875 = vmax.f32 %v859, 0.0
        %v876 = vmax.f32 %v860, 0.0
        %v877 = vmax.f32 %v861, 0.0
        %v878 = vmax.f32 %v862, 0.0
        %v879 = vmax.f32 %v863, 0.0
        %v880 = vmax.f32 %v864, 0.0
        %v881 = vmax.f32 %v865, 0.0
        %v882 = vmax.f32 %v866, 0.0
        %v883 = vmax.f32 %v867, 0.0
        %v884 = vmax.f32 %v868, 0.0
        %v885 = vmax.f32 %v869, 0.0
        %v886 = vmax.f32 %v870, 0.0
        %v887 = vmax.f32 %v871, 0.0
        %v888 = vmax.f32 %v872, 0.0
        %v889 = vmax.f32 %v873, 0.0
        %v890 = vmax.f32 %v874, 0.0
        %v891 = vsub.f32 %v715, %v811
        %v892 = vsub.f32 %v716, %v812
        %v893 = vsub.f32 %v717, %v813
        %v894 = vsub.f32 %v718, %v814
        %v895 = vsub.f32 %v719, %v815
        %v896 = vsub.f32 %v720, %v816
        %v897 = vsub.f32 %v721, %v817
        %v898 = vsub.f32 %v722, %v818
        %v899 = vsub.f32 %v723, %v819
        %v900 = vsub.f32 %v724, %v820
        %v901 = vsub.f32 %v725, %v821
        %v902 = vsub.f32 %v726, %v822
        %v903 = vsub.f32 %v727, %v823
        %v904 = vsub.f32 %v728, %v824
        %v905 = vsub.f32 %v729, %v825
        %v906 = vsub.f32 %v730, %v826
        %v907 = vadd.f32 %v875, 1e-05
        %v908 = vadd.f32 %v876, 1e-05
        %v909 = vadd.f32 %v877, 1e-05
        %v910 = vadd.f32 %v878, 1e-05
        %v911 = vadd.f32 %v879, 1e-05
        %v912 = vadd.f32 %v880, 1e-05
        %v913 = vadd.f32 %v881, 1e-05
        %v914 = vadd.f32 %v882, 1e-05
        %v915 = vadd.f32 %v883, 1e-05
        %v916 = vadd.f32 %v884, 1e-05
        %v917 = vadd.f32 %v885, 1e-05
        %v918 = vadd.f32 %v886, 1e-05
        %v919 = vadd.f32 %v887, 1e-05
        %v920 = vadd.f32 %v888, 1e-05
        %v921 = vadd.f32 %v889, 1e-05
        %v922 = vadd.f32 %v890, 1e-05
        %v923 = vrsqrt.pop %v907
        %v924 = vrsqrt.pop %v908
        %v925 = vrsqrt.pop %v909
        %v926 = vrsqrt.pop %v910
        %v927 = vrsqrt.pop %v911
        %v928 = vrsqrt.pop %v912
        %v929 = vrsqrt.pop %v913
        %v930 = vrsqrt.pop %v914
        %v931 = vrsqrt.pop %v915
        %v932 = vrsqrt.pop %v916
        %v933 = vrsqrt.pop %v917
        %v934 = vrsqrt.pop %v918
        %v935 = vrsqrt.pop %v919
        %v936 = vrsqrt.pop %v920
        %v937 = vrsqrt.pop %v921
        %v938 = vrsqrt.pop %v922
        %v939 = vmul.f32 %v891, %v923
        %v940 = vmul.f32 %v892, %v924
        %v941 = vmul.f32 %v893, %v925
        %v942 = vmul.f32 %v894, %v926
        %v943 = vmul.f32 %v895, %v927
        %v944 = vmul.f32 %v896, %v928
        %v945 = vmul.f32 %v897, %v929
        %v946 = vmul.f32 %v898, %v930
        %v947 = vmul.f32 %v899, %v931
        %v948 = vmul.f32 %v900, %v932
        %v949 = vmul.f32 %v901, %v933
        %v950 = vmul.f32 %v902, %v934
        %v951 = vmul.f32 %v903, %v935
        %v952 = vmul.f32 %v904, %v936
        %v953 = vmul.f32 %v905, %v937
        %v954 = vmul.f32 %v906, %v938
        %v955 = vlaneseq
        %v956 = vshrl.u32 %v955, 7
        %v957 = vsub.s32 3, %v956
        %v958 = vrot.slane %v277, %v957
        %v959 = vmul.f32 %v939, %v958
        %v960 = vmul.f32 %v940, %v958
        %v961 = vmul.f32 %v941, %v958
        %v962 = vmul.f32 %v942, %v958
        %v963 = vmul.f32 %v943, %v958
        %v964 = vmul.f32 %v944, %v958
        %v965 = vmul.f32 %v945, %v958
        %v966 = vmul.f32 %v946, %v958
        %v967 = vmul.f32 %v947, %v958
        %v968 = vmul.f32 %v948, %v958
        %v969 = vmul.f32 %v949, %v958
        %v970 = vmul.f32 %v950, %v958
        %v971 = vmul.f32 %v951, %v958
        %v972 = vmul.f32 %v952, %v958
        %v973 = vmul.f32 %v953, %v958
        %v974 = vmul.f32 %v954, %v958
        %v975 = vlaneseq
        %v976 = vshrl.u32 %v975, 7
        %v977 = vsub.s32 4, %v976
        %v978 = vrot.slane %v277, %v977
        %v979 = vadd.f32 %v959, %v978
        %v980 = vadd.f32 %v960, %v978
        %v981 = vadd.f32 %v961, %v978
        %v982 = vadd.f32 %v962, %v978
        %v983 = vadd.f32 %v963, %v978
        %v984 = vadd.f32 %v964, %v978
        %v985 = vadd.f32 %v965, %v978
        %v986 = vadd.f32 %v966, %v978
        %v987 = vadd.f32 %v967, %v978
        %v988 = vadd.f32 %v968, %v978
        %v989 = vadd.f32 %v969, %v978
        %v990 = vadd.f32 %v970, %v978
        %v991 = vadd.f32 %v971, %v978
        %v992 = vadd.f32 %v972, %v978
        %v993 = vadd.f32 %v973, %v978
        %v994 = vadd.f32 %v974, %v978
        %v995 = vpack.c.bf16 %v980, %v979
        %v996 = vpack.c.bf16 %v982, %v981
        %v997 = vpack.c.bf16 %v984, %v983
        %v998 = vpack.c.bf16 %v986, %v985
        %v999 = vpack.c.bf16 %v988, %v987
        %v1000 = vpack.c.bf16 %v990, %v989
        %v1001 = vpack.c.bf16 %v992, %v991
        %v1002 = vpack.c.bf16 %v994, %v993
        %v1003 = vld [vmem:[#allocation8] sm:$0xf]
        %v1004 = vld [vmem:[#allocation8 + $0x4] sm:$0xf]
        %v1005 = vld [vmem:[#allocation8 + $0x8] sm:$0xf]
        %v1006 = vld [vmem:[#allocation8 + $0xc] sm:$0xf]
        %v1007 = vld [vmem:[#allocation8 + $0x10] sm:$0xf]
        %v1008 = vld [vmem:[#allocation8 + $0x14] sm:$0xf]
        %v1009 = vld [vmem:[#allocation8 + $0x18] sm:$0xf]
        %v1010 = vld [vmem:[#allocation8 + $0x1c] sm:$0xf]
        %v1011 = vld [vmem:[#allocation8 + $0x20] sm:$0xf]
        %v1012 = vld [vmem:[#allocation8 + $0x24] sm:$0xf]
        %v1013 = vld [vmem:[#allocation8 + $0x28] sm:$0xf]
        %v1014 = vld [vmem:[#allocation8 + $0x2c] sm:$0xf]
        %v1015 = vld [vmem:[#allocation8 + $0x30] sm:$0xf]
        %v1016 = vld [vmem:[#allocation8 + $0x34] sm:$0xf]
        %v1017 = vld [vmem:[#allocation8 + $0x38] sm:$0xf]
        %v1018 = vld [vmem:[#allocation8 + $0x3c] sm:$0xf]
        %v1019 = vlaneseq
        %v1020 = vshrl.u32 %v1019, 7
        %v1021 = vsub.s32 5, %v1020
        %v1022 = vrot.slane %v277, %v1021
        %v1039 = vunpack.c.l.b16 %v1003
        %v1040 = vunpack.c.l.b16 %v1004
        %v1041 = vunpack.c.l.b16 %v1005
        %v1042 = vunpack.c.l.b16 %v1006
        %v1043 = vunpack.c.l.b16 %v1007
        %v1044 = vunpack.c.l.b16 %v1008
        %v1045 = vunpack.c.l.b16 %v1009
        %v1046 = vunpack.c.l.b16 %v1010
        %v1047 = vunpack.c.l.b16 %v1011
        %v1048 = vunpack.c.l.b16 %v1012
        %v1049 = vunpack.c.l.b16 %v1013
        %v1050 = vunpack.c.l.b16 %v1014
        %v1051 = vunpack.c.l.b16 %v1015
        %v1052 = vunpack.c.l.b16 %v1016
        %v1053 = vunpack.c.l.b16 %v1017
        %v1054 = vunpack.c.l.b16 %v1018
        %v1055 = vpack.c.b16 %v1040, %v1039
        %v1056 = vpack.c.b16 %v1042, %v1041
        %v1057 = vpack.c.b16 %v1044, %v1043
        %v1058 = vpack.c.b16 %v1046, %v1045
        %v1059 = vpack.c.b16 %v1048, %v1047
        %v1060 = vpack.c.b16 %v1050, %v1049
        %v1061 = vpack.c.b16 %v1052, %v1051
        %v1062 = vpack.c.b16 %v1054, %v1053
        %1071 = vmatprep.subr.bf16.mxu0 0
        %1072 = vmatpush1.bf16.msra.mxu0 %v1055
        %1073 = vmatprep.subr.bf16.mxu0 0
        %1074 = vmatpush1.bf16.msra.mxu0 %v1056
        %1075 = vmatprep.subr.bf16.mxu0 0
        %1076 = vmatpush1.bf16.msra.mxu0 %v1057
        %1077 = vmatprep.subr.bf16.mxu0 0
        %1078 = vmatpush1.bf16.msra.mxu0 %v1058
        %1079 = vmatprep.subr.bf16.mxu0 0
        %1080 = vmatpush1.bf16.msra.mxu0 %v1059
        %1081 = vmatprep.subr.bf16.mxu0 0
        %1082 = vmatpush1.bf16.msra.mxu0 %v1060
        %1083 = vmatprep.subr.bf16.mxu0 0
        %1084 = vmatpush1.bf16.msra.mxu0 %v1061
        %1085 = vmatprep.subr.bf16.mxu0 0
        %1086 = vmatpush1.bf16.msra.mxu0 %v1062
        %1087 = vmatprep.subr.bf16.mxu0 0
        %1088 = vmatpush1.bf16.msra.mxu0 0
        %1089 = vmatprep.subr.bf16.mxu0 0
        %1090 = vmatpush1.bf16.msra.mxu0 0
        %1091 = vmatprep.subr.bf16.mxu0 0
        %1092 = vmatpush1.bf16.msra.mxu0 0
        %1093 = vmatprep.subr.bf16.mxu0 0
        %1094 = vmatpush1.bf16.msra.mxu0 0
        %1095 = vmatprep.subr.bf16.mxu0 0
        %1096 = vmatpush1.bf16.msra.mxu0 0
        %1097 = vmatprep.subr.bf16.mxu0 0
        %1098 = vmatpush1.bf16.msra.mxu0 0
        %1099 = vmatprep.subr.bf16.mxu0 0
        %1100 = vmatpush1.bf16.msra.mxu0 0
        %1101 = vmatprep.subr.bf16.mxu0 0
        %1102 = vmatpush1.bf16.msra.mxu0 0
        %1103 = vmatprep.mubr.bf16.mxu0 0
        %1104 = vmatmul.mubr.bf16.gmra.mrb[0].mxu0 %v995
        %v1105 = vpop.f32.mrb[0].mxu0
        %v1106 = vadd.f32 %v1022, %v1105
        %v1107 = vpop.f32.mrb[0].mxu0
        %v1108 = vpop.f32.mrb[0].mxu0
        %v1109 = vadd.f32 %v1022, %v1108
        %v1110 = vpop.f32.mrb[0].mxu0
        %1111 = vmatprep.mubr.bf16.mxu0 0
        %1112 = vmatmul.mubr.bf16.gmra.mrb[0].mxu0 %v996
        %v1113 = vpop.f32.mrb[0].mxu0
        %v1114 = vadd.f32 %v1022, %v1113
        %v1115 = vpop.f32.mrb[0].mxu0
        %v1116 = vpop.f32.mrb[0].mxu0
        %v1117 = vadd.f32 %v1022, %v1116
        %v1118 = vpop.f32.mrb[0].mxu0
        %1119 = vmatprep.mubr.bf16.mxu0 0
        %1120 = vmatmul.mubr.bf16.gmra.mrb[0].mxu0 %v997
        %v1121 = vpop.f32.mrb[0].mxu0
        %v1122 = vadd.f32 %v1022, %v1121
        %v1123 = vpop.f32.mrb[0].mxu0
        %v1124 = vpop.f32.mrb[0].mxu0
        %v1125 = vadd.f32 %v1022, %v1124
        %v1126 = vpop.f32.mrb[0].mxu0
        %1127 = vmatprep.mubr.bf16.mxu0 0
        %1128 = vmatmul.mubr.bf16.gmra.mrb[0].mxu0 %v998
        %v1129 = vpop.f32.mrb[0].mxu0
        %v1130 = vadd.f32 %v1022, %v1129
        %v1131 = vpop.f32.mrb[0].mxu0
        %v1132 = vpop.f32.mrb[0].mxu0
        %v1133 = vadd.f32 %v1022, %v1132
        %v1134 = vpop.f32.mrb[0].mxu0
        %1135 = vmatprep.mubr.bf16.mxu0 0
        %1136 = vmatmul.mubr.bf16.gmra.mrb[0].mxu0 %v999
        %v1137 = vpop.f32.mrb[0].mxu0
        %v1138 = vadd.f32 %v1022, %v1137
        %v1139 = vpop.f32.mrb[0].mxu0
        %v1140 = vpop.f32.mrb[0].mxu0
        %v1141 = vadd.f32 %v1022, %v1140
        %v1142 = vpop.f32.mrb[0].mxu0
        %1143 = vmatprep.mubr.bf16.mxu0 0
        %1144 = vmatmul.mubr.bf16.gmra.mrb[0].mxu0 %v1000
        %v1145 = vpop.f32.mrb[0].mxu0
        %v1146 = vadd.f32 %v1022, %v1145
        %v1147 = vpop.f32.mrb[0].mxu0
        %v1148 = vpop.f32.mrb[0].mxu0
        %v1149 = vadd.f32 %v1022, %v1148
        %v1150 = vpop.f32.mrb[0].mxu0
        %1151 = vmatprep.mubr.bf16.mxu0 0
        %1152 = vmatmul.mubr.bf16.gmra.mrb[0].mxu0 %v1001
        %v1153 = vpop.f32.mrb[0].mxu0
        %v1154 = vadd.f32 %v1022, %v1153
        %v1155 = vpop.f32.mrb[0].mxu0
        %v1156 = vpop.f32.mrb[0].mxu0
        %v1157 = vadd.f32 %v1022, %v1156
        %v1158 = vpop.f32.mrb[0].mxu0
        %1159 = vmatprep.mubr.bf16.mxu0 0
        %1160 = vmatmul.mubr.bf16.gmra.mrb[0].mxu0 %v1002
        %v1161 = vpop.f32.mrb[0].mxu0
        %v1162 = vadd.f32 %v1022, %v1161
        %v1163 = vpop.f32.mrb[0].mxu0
        %v1164 = vpop.f32.mrb[0].mxu0
        %v1165 = vadd.f32 %v1022, %v1164
        %v1166 = vpop.f32.mrb[0].mxu0
        %1167 = vdwg.mxu0
        %1168 = vmax.xlane.f32.xlu0 %v1106
        %v1169 = vpop.xlane.xlu0 %1168
        %1170 = vmax.xlane.f32.xlu0 %v1109
        %v1171 = vpop.xlane.xlu0 %1170
        %1172 = vmax.xlane.f32.xlu0 %v1114
        %v1173 = vpop.xlane.xlu0 %1172
        %1174 = vmax.xlane.f32.xlu0 %v1117
        %v1175 = vpop.xlane.xlu0 %1174
        %1176 = vmax.xlane.f32.xlu0 %v1122
        %v1177 = vpop.xlane.xlu0 %1176
        %1178 = vmax.xlane.f32.xlu0 %v1125
        %v1179 = vpop.xlane.xlu0 %1178
        %1180 = vmax.xlane.f32.xlu0 %v1130
        %v1181 = vpop.xlane.xlu0 %1180
        %1182 = vmax.xlane.f32.xlu0 %v1133
        %v1183 = vpop.xlane.xlu0 %1182
        %1184 = vmax.xlane.f32.xlu0 %v1138
        %v1185 = vpop.xlane.xlu0 %1184
        %1186 = vmax.xlane.f32.xlu0 %v1141
        %v1187 = vpop.xlane.xlu0 %1186
        %1188 = vmax.xlane.f32.xlu0 %v1146
        %v1189 = vpop.xlane.xlu0 %1188
        %1190 = vmax.xlane.f32.xlu0 %v1149
        %v1191 = vpop.xlane.xlu0 %1190
        %1192 = vmax.xlane.f32.xlu0 %v1154
        %v1193 = vpop.xlane.xlu0 %1192
        %1194 = vmax.xlane.f32.xlu0 %v1157
        %v1195 = vpop.xlane.xlu0 %1194
        %1196 = vmax.xlane.f32.xlu0 %v1162
        %v1197 = vpop.xlane.xlu0 %1196
        %1198 = vmax.xlane.f32.xlu0 %v1165
        %v1199 = vpop.xlane.xlu0 %1198
        %v1200 = vsub.f32 %v1106, %v1169
        %v1201 = vsub.f32 %v1109, %v1171
        %v1202 = vsub.f32 %v1114, %v1173
        %v1203 = vsub.f32 %v1117, %v1175
        %v1204 = vsub.f32 %v1122, %v1177
        %v1205 = vsub.f32 %v1125, %v1179
        %v1206 = vsub.f32 %v1130, %v1181
        %v1207 = vsub.f32 %v1133, %v1183
        %v1208 = vsub.f32 %v1138, %v1185
        %v1209 = vsub.f32 %v1141, %v1187
        %v1210 = vsub.f32 %v1146, %v1189
        %v1211 = vsub.f32 %v1149, %v1191
        %v1212 = vsub.f32 %v1154, %v1193
        %v1213 = vsub.f32 %v1157, %v1195
        %v1214 = vsub.f32 %v1162, %v1197
        %v1215 = vsub.f32 %v1165, %v1199
        %v1216 = vmul.f32 %v1200, 1.442695
        %v1217 = vpow.pop %v1216
        %v1218 = vmul.f32 %v1201, 1.442695
        %v1219 = vpow.pop %v1218
        %v1220 = vmul.f32 %v1202, 1.442695
        %v1221 = vpow.pop %v1220
        %v1222 = vmul.f32 %v1203, 1.442695
        %v1223 = vpow.pop %v1222
        %v1224 = vmul.f32 %v1204, 1.442695
        %v1225 = vpow.pop %v1224
        %v1226 = vmul.f32 %v1205, 1.442695
        %v1227 = vpow.pop %v1226
        %v1228 = vmul.f32 %v1206, 1.442695
        %v1229 = vpow.pop %v1228
        %v1230 = vmul.f32 %v1207, 1.442695
        %v1231 = vpow.pop %v1230
        %v1232 = vmul.f32 %v1208, 1.442695
        %v1233 = vpow.pop %v1232
        %v1234 = vmul.f32 %v1209, 1.442695
        %v1235 = vpow.pop %v1234
        %v1236 = vmul.f32 %v1210, 1.442695
        %v1237 = vpow.pop %v1236
        %v1238 = vmul.f32 %v1211, 1.442695
        %v1239 = vpow.pop %v1238
        %v1240 = vmul.f32 %v1212, 1.442695
        %v1241 = vpow.pop %v1240
        %v1242 = vmul.f32 %v1213, 1.442695
        %v1243 = vpow.pop %v1242
        %v1244 = vmul.f32 %v1214, 1.442695
        %v1245 = vpow.pop %v1244
        %v1246 = vmul.f32 %v1215, 1.442695
        %v1247 = vpow.pop %v1246
        %1248 = vadd.xlane.f32.xlu0 %v1217
        %v1249 = vpop.xlane.xlu0 %1248
        %1250 = vadd.xlane.f32.xlu0 %v1219
        %v1251 = vpop.xlane.xlu0 %1250
        %1252 = vadd.xlane.f32.xlu0 %v1221
        %v1253 = vpop.xlane.xlu0 %1252
        %1254 = vadd.xlane.f32.xlu0 %v1223
        %v1255 = vpop.xlane.xlu0 %1254
        %1256 = vadd.xlane.f32.xlu0 %v1225
        %v1257 = vpop.xlane.xlu0 %1256
        %1258 = vadd.xlane.f32.xlu0 %v1227
        %v1259 = vpop.xlane.xlu0 %1258
        %1260 = vadd.xlane.f32.xlu0 %v1229
        %v1261 = vpop.xlane.xlu0 %1260
        %1262 = vadd.xlane.f32.xlu0 %v1231
        %v1263 = vpop.xlane.xlu0 %1262
        %1264 = vadd.xlane.f32.xlu0 %v1233
        %v1265 = vpop.xlane.xlu0 %1264
        %1266 = vadd.xlane.f32.xlu0 %v1235
        %v1267 = vpop.xlane.xlu0 %1266
        %1268 = vadd.xlane.f32.xlu0 %v1237
        %v1269 = vpop.xlane.xlu0 %1268
        %1270 = vadd.xlane.f32.xlu0 %v1239
        %v1271 = vpop.xlane.xlu0 %1270
        %1272 = vadd.xlane.f32.xlu0 %v1241
        %v1273 = vpop.xlane.xlu0 %1272
        %1274 = vadd.xlane.f32.xlu0 %v1243
        %v1275 = vpop.xlane.xlu0 %1274
        %1276 = vadd.xlane.f32.xlu0 %v1245
        %v1277 = vpop.xlane.xlu0 %1276
        %1278 = vadd.xlane.f32.xlu0 %v1247
        %v1279 = vpop.xlane.xlu0 %1278
        %v1280 = vlog2.pop %v1249
        %v1281 = vmul.f32 %v1280, 0.6931472
        %v1282 = vlog2.pop %v1251
        %v1283 = vmul.f32 %v1282, 0.6931472
        %v1284 = vlog2.pop %v1253
        %v1285 = vmul.f32 %v1284, 0.6931472
        %v1286 = vlog2.pop %v1255
        %v1287 = vmul.f32 %v1286, 0.6931472
        %v1288 = vlog2.pop %v1257
        %v1289 = vmul.f32 %v1288, 0.6931472
        %v1290 = vlog2.pop %v1259
        %v1291 = vmul.f32 %v1290, 0.6931472
        %v1292 = vlog2.pop %v1261
        %v1293 = vmul.f32 %v1292, 0.6931472
        %v1294 = vlog2.pop %v1263
        %v1295 = vmul.f32 %v1294, 0.6931472
        %v1296 = vlog2.pop %v1265
        %v1297 = vmul.f32 %v1296, 0.6931472
        %v1298 = vlog2.pop %v1267
        %v1299 = vmul.f32 %v1298, 0.6931472
        %v1300 = vlog2.pop %v1269
        %v1301 = vmul.f32 %v1300, 0.6931472
        %v1302 = vlog2.pop %v1271
        %v1303 = vmul.f32 %v1302, 0.6931472
        %v1304 = vlog2.pop %v1273
        %v1305 = vmul.f32 %v1304, 0.6931472
        %v1306 = vlog2.pop %v1275
        %v1307 = vmul.f32 %v1306, 0.6931472
        %v1308 = vlog2.pop %v1277
        %v1309 = vmul.f32 %v1308, 0.6931472
        %v1310 = vlog2.pop %v1279
        %v1311 = vmul.f32 %v1310, 0.6931472
        %v1312 = vsub.f32 %v1200, %v1281
        %v1313 = vsub.f32 %v1201, %v1283
        %v1314 = vsub.f32 %v1202, %v1285
        %v1315 = vsub.f32 %v1203, %v1287
        %v1316 = vsub.f32 %v1204, %v1289
        %v1317 = vsub.f32 %v1205, %v1291
        %v1318 = vsub.f32 %v1206, %v1293
        %v1319 = vsub.f32 %v1207, %v1295
        %v1320 = vsub.f32 %v1208, %v1297
        %v1321 = vsub.f32 %v1209, %v1299
        %v1322 = vsub.f32 %v1210, %v1301
        %v1323 = vsub.f32 %v1211, %v1303
        %v1324 = vsub.f32 %v1212, %v1305
        %v1325 = vsub.f32 %v1213, %v1307
        %v1326 = vsub.f32 %v1214, %v1309
        %v1327 = vsub.f32 %v1215, %v1311
        %1328 = vst [vmem:[%s257] sm:$0xff] %v1312
        %1329 = vst [vmem:[%s257 + $0x8] sm:$0xff] %v1313
        %1330 = vst [vmem:[%s257 + $0x10] sm:$0xff] %v1314
        %1331 = vst [vmem:[%s257 + $0x18] sm:$0xff] %v1315
        %1332 = vst [vmem:[%s257 + $0x20] sm:$0xff] %v1316
        %1333 = vst [vmem:[%s257 + $0x28] sm:$0xff] %v1317
        %1334 = vst [vmem:[%s257 + $0x30] sm:$0xff] %v1318
        %1335 = vst [vmem:[%s257 + $0x38] sm:$0xff] %v1319
        %1336 = vst [vmem:[%s257 + $0x40] sm:$0xff] %v1320
        %1337 = vst [vmem:[%s257 + $0x48] sm:$0xff] %v1321
        %1338 = vst [vmem:[%s257 + $0x50] sm:$0xff] %v1322
        %1339 = vst [vmem:[%s257 + $0x58] sm:$0xff] %v1323
        %1340 = vst [vmem:[%s257 + $0x60] sm:$0xff] %v1324
        %1341 = vst [vmem:[%s257 + $0x68] sm:$0xff] %v1325
        %1342 = vst [vmem:[%s257 + $0x70] sm:$0xff] %v1326
        %1343 = vst [vmem:[%s257 + $0x78] sm:$0xff] %v1327
        %s1344 = sand.u32 %s120, 1
        %s1345 = scalar_lea.sflag [#allocation4], %s1344
        %s1346 = sand.u32 %s120, 1
        %s1347 = smul.addr %s1346, 128
        %s1348 = scalar_lea.vmem [#allocation10], %s1347
        // Predicated region
        $region53: #{_neuralnet_forward.1} parent=35 // pred_check
          %p1349 = pneg %p130
        $region54: #{_neuralnet_forward.1} parent=35 // pred_check_branch
          %1351 = sbr.rel (%p1349) target = $region56
        $region55: #{_neuralnet_forward.1} parent=35 // pred_region
          %s1352 = smul.u32 16, %s23
          %s1354 = ssub.s32 2048, 2048
          %1355 = vsyncadd %s1345, %s1354
          %s1356 = smul.addr %s1352, 128
          %s1357 = scalar_lea.hbm %s4, %s1356
          %s1358 = sshll.u32 %s1348, 4
          %s1359 = int_to_ptr.vmem [resolvable:$true] %s1358
          %1364 = dma.vmem_to_hbm [thread:$0]  %s1359, 2048, %s1357, %s1345, 128, 128, 8
        $region56: #{_neuralnet_forward.1} parent=35 // pred_fallthru
          _
      $region36: #{_neuralnet_forward.1} parent=5 // pred_fallthru
        _
      %p1365 = scmp.le.s32.totalorder 2, %s18
      // Predicated region
      $region57: #{_neuralnet_forward.1} parent=5 // pred_check
        %p1366 = pneg %p1365
      $region58: #{_neuralnet_forward.1} parent=5 // pred_check_branch
        %1368 = sbr.rel (%p1366) target = $region60
      $region59: #{_neuralnet_forward.1} parent=5 // pred_region
        %s1369 = ssub.s32 %s18, 2
        // Predicated region
        $region61: #{_neuralnet_forward.1} parent=59 // pred_check
          %p1370 = pneg %p136
        $region62: #{_neuralnet_forward.1} parent=59 // pred_check_branch
          %1372 = sbr.rel (%p1370) target = $region64
        $region63: #{_neuralnet_forward.1} parent=59 // pred_region
          %s1373 = sand.u32 %s121, 1
          %s1374 = scalar_lea.sflag [#allocation4], %s1373
          %s1375 = sand.u32 %s121, 1
          %s1376 = smul.addr %s1375, 128
          %s1377 = scalar_lea.vmem [#allocation10], %s1376
          %1378 = dma.done %s1374, 2048
        $region64: #{_neuralnet_forward.1} parent=59 // pred_fallthru
          _
      $region60: #{_neuralnet_forward.1} parent=5 // pred_fallthru
        _
    $region6: #{_neuralnet_forward.1} parent=1 // loop_footer
      %s22 = sadd.s32 1, %s18
    $region7: #{_neuralnet_forward.1} parent=1 // loop_footer_branch
      %17 = sbr.rel target = $region3
    $region8: #{_neuralnet_forward.1} parent=1 // loop_exit
      _
    %1379 = vsyncpa [#allocation3], 1
    %s1380 = scalar_lea.sflag [#allocation3], 1
    %1381 = vsyncpa %s1380, 1
    %1382 = vsyncpa [#allocation6], 1
    %1383 = vsyncpa [#allocation9], 1
    %1384 = vsyncpa [#allocation4], 1
    %s1385 = scalar_lea.sflag [#allocation4], 1
    %1386 = vsyncpa %s1385, 1

// kernel: _neuralnet_forward.1
$region0: #{_neuralnet_forward.1}
  #allocation0 [shape = 'u32[]', space=smem, size = 0x4, offset = 0x4, fixed_abs, tag = 'smem constant byte address 0x4 - core index']
  #allocation1 [shape = 'u32[144,128]{1,0:T(1,128)}', space=vmem, size = 0x12000, scoped, tag = 'internal scratch']
  %s0 = inlined_call_operand.hbm [shape: f32[256,128], index: 0, kind: input, shape index: {}]
  %s1 = inlined_call_operand.hbm [shape: f32[8,128], index: 1, kind: input, shape index: {}]
  %s2 = inlined_call_operand.hbm [shape: bf16[128,128], index: 2, kind: input, shape index: {}]
  %s3 = inlined_call_operand.hbm [shape: bf16[128,128], index: 3, kind: input, shape index: {}]
  %s4 = inlined_call_operand.hbm [shape: f32[256,128], index: 4, kind: output, shape index: {}]
  %s5 = sld [smem:[#allocation0]]
  $region65: #{_neuralnet_forward.1} parent=0
    _
  %s7 = ssub.s32 1, %s5
  %s8 = scalar_select 0, %s7, %s5
  $region1: #{_neuralnet_forward.1} parent=0
    #allocation2 [shape = 'u8[131072]{0}', space=vmem, size = 0x20000, scoped, tag = 'input window, operand 0']
    #allocation3 [shape = 's32[2]{0}', space=sflag, size = 0x8, scoped, tag = 'scoped memory for _neuralnet_forward.1']
    #allocation4 [shape = 's32[2]{0}', space=sflag, size = 0x8, scoped, tag = 'scoped memory for _neuralnet_forward.1']
    #allocation5 [shape = 'u8[4096]{0}', space=vmem, size = 0x1000, scoped, tag = 'input window, operand 1, single buffered']
    #allocation6 [shape = 's32[1]{0}', space=sflag, size = 0x4, scoped, tag = 'scoped memory for _neuralnet_forward.1']
    #allocation7 [shape = 'u8[32768]{0}', space=vmem, size = 0x8000, scoped, tag = 'input window, operand 2, single buffered']
    #allocation8 [shape = 'u8[32768]{0}', space=vmem, size = 0x8000, scoped, tag = 'input window, operand 3, single buffered']
    #allocation9 [shape = 's32[1]{0}', space=sflag, size = 0x4, scoped, tag = 'scoped memory for _neuralnet_forward.1']
    #allocation10 [shape = 'u8[131072]{0}', space=vmem, size = 0x20000, scoped, tag = 'output window, operand 0']
    %9 = vsyncpa [#allocation3], 0
    %s10 = scalar_lea.sflag [#allocation3], 1
    %11 = vsyncpa %s10, 0
    %12 = vsyncpa [#allocation6], 0
    %13 = vsyncpa [#allocation9], 0
    %14 = vsyncpa [#allocation4], 0
    %s15 = scalar_lea.sflag [#allocation4], 1
    %16 = vsyncpa %s15, 0
    loop: start=0, step=1, limit=4
    $region2: #{_neuralnet_forward.1} parent=1 // loop_pre_header
      _
    $region3: #{_neuralnet_forward.1} parent=1 // loop_header
      %s18 = sphi 0, %s22
      %p19 = scmp.ge.s32.totalorder %s18, 4
      %s28 = sphi 0, %s30
      %s31 = sphi 0, %s28
      %s32 = sphi 0, %s31
      %s48 = sphi 0, %s32
      %s52 = sphi 0, %s52
      %s54 = sphi 0, %s52
      %s55 = sphi 0, %s54
      %s69 = sphi 0, %s55
      %s73 = sphi 0, %s73
      %s75 = sphi 0, %s73
      %s76 = sphi 0, %s75
      %s90 = sphi 0, %s76
      %s94 = sphi 0, %s94
      %s96 = sphi 0, %s94
      %s97 = sphi 0, %s96
      %s111 = sphi 0, %s97
      %s117 = sphi 0, %s119
      %s120 = sphi 0, %s117
      %s121 = sphi 0, %s120
      %s137 = sphi 0, %s121
    $region4: #{_neuralnet_forward.1} parent=1 // loop_header_branch
      %21 = sbr.rel (%p19) target = $region8
    $region5: #{_neuralnet_forward.1} parent=1 // loop_body
      %s23 = ssub.s32 %s18, 1
      %s24 = ssub.s32 %s18, 2
      %s25 = sadd.s32 %s18, 1
      %s26 = ssub.s32 %s18, %s25
      %p27 = scmp.eq.s32.totalorder %s26, 0
      %s29 = sadd.s32 %s28, 1
      %s30 = scalar_select %p27, %s28, %s29
      %p33 = pneg %p27
      %p34 = scmp.eq.s32.totalorder %s18, 1
      %p35 = por %p33, %p34
      %p36 = scmp.ne.s32.totalorder %s28, %s31
      %p37 = scmp.eq.s32.totalorder %s18, 0
      %p38 = por %p36, %p37
      %p39 = scmp.ne.s32.totalorder %s28, %s31
      %p40 = scmp.eq.s32.totalorder %s23, 1
      %p41 = por %p39, %p40
      %p42 = scmp.ne.s32.totalorder %s31, %s32
      %p43 = scmp.eq.s32.totalorder %s23, 0
      %p44 = por %p42, %p43
      %p45 = scmp.ne.s32.totalorder %s31, %s32
      %p46 = scmp.eq.s32.totalorder %s24, 1
      %p47 = por %p45, %p46
      %p49 = scmp.ne.s32.totalorder %s32, %s48
      %p50 = scmp.eq.s32.totalorder %s24, 0
      %p51 = por %p49, %p50
      %s53 = sadd.s32 %s52, 1
      %p56 = scmp.eq.s32.totalorder %s18, 1
      %p57 = scmp.ne.s32.totalorder %s52, %s54
      %p58 = scmp.eq.s32.totalorder %s18, 0
      %p59 = por %p57, %p58
      %p60 = scmp.ne.s32.totalorder %s52, %s54
      %p61 = scmp.eq.s32.totalorder %s23, 1
      %p62 = por %p60, %p61
      %p63 = scmp.ne.s32.totalorder %s54, %s55
      %p64 = scmp.eq.s32.totalorder %s23, 0
      %p65 = por %p63, %p64
      %p66 = scmp.ne.s32.totalorder %s54, %s55
      %p67 = scmp.eq.s32.totalorder %s24, 1
      %p68 = por %p66, %p67
      %p70 = scmp.ne.s32.totalorder %s55, %s69
      %p71 = scmp.eq.s32.totalorder %s24, 0
      %p72 = por %p70, %p71
      %s74 = sadd.s32 %s73, 1
      %p77 = scmp.eq.s32.totalorder %s18, 1
      %p78 = scmp.ne.s32.totalorder %s73, %s75
      %p79 = scmp.eq.s32.totalorder %s18, 0
      %p80 = por %p78, %p79
      %p81 = scmp.ne.s32.totalorder %s73, %s75
      %p82 = scmp.eq.s32.totalorder %s23, 1
      %p83 = por %p81, %p82
      %p84 = scmp.ne.s32.totalorder %s75, %s76
      %p85 = scmp.eq.s32.totalorder %s23, 0
      %p86 = por %p84, %p85
      %p87 = scmp.ne.s32.totalorder %s75, %s76
      %p88 = scmp.eq.s32.totalorder %s24, 1
      %p89 = por %p87, %p88
      %p91 = scmp.ne.s32.totalorder %s76, %s90
      %p92 = scmp.eq.s32.totalorder %s24, 0
      %p93 = por %p91, %p92
      %s95 = sadd.s32 %s94, 1
      %p98 = scmp.eq.s32.totalorder %s18, 1
      %p99 = scmp.ne.s32.totalorder %s94, %s96
      %p100 = scmp.eq.s32.totalorder %s18, 0
      %p101 = por %p99, %p100
      %p102 = scmp.ne.s32.totalorder %s94, %s96
      %p103 = scmp.eq.s32.totalorder %s23, 1
      %p104 = por %p102, %p103
      %p105 = scmp.ne.s32.totalorder %s96, %s97
      %p106 = scmp.eq.s32.totalorder %s23, 0
      %p107 = por %p105, %p106
      %p108 = scmp.ne.s32.totalorder %s96, %s97
      %p109 = scmp.eq.s32.totalorder %s24, 1
      %p110 = por %p108, %p109
      %p112 = scmp.ne.s32.totalorder %s97, %s111
      %p113 = scmp.eq.s32.totalorder %s24, 0
      %p114 = por %p112, %p113
      %s115 = ssub.s32 %s18, %s25
      %p116 = scmp.eq.s32.totalorder %s115, 0
      %s118 = sadd.s32 %s117, 1
      %s119 = scalar_select %p116, %s117, %s118
      %p122 = pneg %p116
      %p123 = scmp.eq.s32.totalorder %s18, 1
      %p124 = por %p122, %p123
      %p125 = scmp.ne.s32.totalorder %s117, %s120
      %p126 = scmp.eq.s32.totalorder %s18, 0
      %p127 = por %p125, %p126
      %p128 = scmp.ne.s32.totalorder %s117, %s120
      %p129 = scmp.eq.s32.totalorder %s23, 1
      %p130 = por %p128, %p129
      %p131 = scmp.ne.s32.totalorder %s120, %s121
      %p132 = scmp.eq.s32.totalorder %s23, 0
      %p133 = por %p131, %p132
      %p134 = scmp.ne.s32.totalorder %s120, %s121
      %p135 = scmp.eq.s32.totalorder %s24, 1
      %p136 = por %p134, %p135
      %p138 = scmp.ne.s32.totalorder %s121, %s137
      %p139 = scmp.eq.s32.totalorder %s24, 0
      %p140 = por %p138, %p139
      %p141 = scmp.le.s32.totalorder 1, %s18
      %p142 = scmp.lt.s32.totalorder %s18, 3
      %p143 = pnand %p141, %p142
      %p144 = pneg %p143
      // Predicated region
      $region9: #{_neuralnet_forward.1} parent=5 // pred_check
        _
      $region10: #{_neuralnet_forward.1} parent=5 // pred_check_branch
        %146 = sbr.rel (%p143) target = $region12
      $region11: #{_neuralnet_forward.1} parent=5 // pred_region
        %s147 = ssub.s32 %s18, 1
        // Predicated region
        $region13: #{_neuralnet_forward.1} parent=11 // pred_check
          %p148 = pneg %p65
        $region14: #{_neuralnet_forward.1} parent=11 // pred_check_branch
          %150 = sbr.rel (%p148) target = $region16
        $region15: #{_neuralnet_forward.1} parent=11 // pred_region
          %s152 = ssub.s32 128, 128
          %153 = vsyncadd [#allocation6], %s152
          %s155 = sshll.u32 [#allocation5], 4
          %s156 = int_to_ptr.vmem [resolvable:$true] %s155
          %158 = dma.hbm_to_vmem [thread:$0]  %s1, 128, %s156, [#allocation6]
        $region16: #{_neuralnet_forward.1} parent=11 // pred_fallthru
          _
        // Predicated region
        $region17: #{_neuralnet_forward.1} parent=11 // pred_check
          %p159 = pneg %p86
        $region18: #{_neuralnet_forward.1} parent=11 // pred_check_branch
          %161 = sbr.rel (%p159) target = $region20
        $region19: #{_neuralnet_forward.1} parent=11 // pred_region
          %s163 = ssub.s32 1024, 1024
          %164 = vsyncadd [#allocation6], %s163
          %s165 = sshll.u32 [#allocation7], 4
          %s166 = int_to_ptr.vmem [resolvable:$true] %s165
          %171 = dma.hbm_to_vmem [thread:$0]  %s2, 1024, %s166, [#allocation6], 64, 64, 4
        $region20: #{_neuralnet_forward.1} parent=11 // pred_fallthru
          _
        // Predicated region
        $region21: #{_neuralnet_forward.1} parent=11 // pred_check
          %p172 = pneg %p107
        $region22: #{_neuralnet_forward.1} parent=11 // pred_check_branch
          %174 = sbr.rel (%p172) target = $region24
        $region23: #{_neuralnet_forward.1} parent=11 // pred_region
          %s176 = ssub.s32 1024, 1024
          %177 = vsyncadd [#allocation9], %s176
          %s178 = sshll.u32 [#allocation8], 4
          %s179 = int_to_ptr.vmem [resolvable:$true] %s178
          %184 = dma.hbm_to_vmem [thread:$0]  %s3, 1024, %s179, [#allocation9], 64, 64, 4
        $region24: #{_neuralnet_forward.1} parent=11 // pred_fallthru
          _
      $region12: #{_neuralnet_forward.1} parent=5 // pred_fallthru
        _
      %p185 = scmp.lt.s32.totalorder %s18, 2
      // Predicated region
      $region25: #{_neuralnet_forward.1} parent=5 // pred_check
        %p186 = pneg %p185
      $region26: #{_neuralnet_forward.1} parent=5 // pred_check_branch
        %188 = sbr.rel (%p186) target = $region28
      $region27: #{_neuralnet_forward.1} parent=5 // pred_region
        // Predicated region
        $region29: #{_neuralnet_forward.1} parent=27 // pred_check
          %p189 = pneg %p38
        $region30: #{_neuralnet_forward.1} parent=27 // pred_check_branch
          %191 = sbr.rel (%p189) target = $region32
        $region31: #{_neuralnet_forward.1} parent=27 // pred_region
          %s192 = sand.u32 %s28, 1
          %s193 = scalar_lea.sflag [#allocation3], %s192
          %s194 = sand.u32 %s28, 1
          %s195 = smul.addr %s194, 128
          %s196 = scalar_lea.vmem [#allocation2], %s195
          %s197 = smul.u32 16, %s18
          %s199 = ssub.s32 2048, 2048
          %200 = vsyncadd %s193, %s199
          %s201 = smul.addr %s197, 128
          %s202 = scalar_lea.hbm %s0, %s201
          %s203 = sshll.u32 %s196, 4
          %s204 = int_to_ptr.vmem [resolvable:$true] %s203
          %209 = dma.hbm_to_vmem [thread:$0]  %s202, 2048, %s204, %s193, 128, 128, 8
        $region32: #{_neuralnet_forward.1} parent=27 // pred_fallthru
          _
      $region28: #{_neuralnet_forward.1} parent=5 // pred_fallthru
        _
      %p210 = scmp.le.s32.totalorder 1, %s18
      %p211 = scmp.lt.s32.totalorder %s18, 3
      %p212 = pnand %p210, %p211
      %p213 = pneg %p212
      // Predicated region
      $region33: #{_neuralnet_forward.1} parent=5 // pred_check
        _
      $region34: #{_neuralnet_forward.1} parent=5 // pred_check_branch
        %215 = sbr.rel (%p212) target = $region36
      $region35: #{_neuralnet_forward.1} parent=5 // pred_region
        %s216 = ssub.s32 %s18, 1
        %s217 = sand.u32 %s31, 1
        %s218 = scalar_lea.sflag [#allocation3], %s217
        %s219 = sand.u32 %s31, 1
        %s220 = smul.addr %s219, 128
        %s221 = scalar_lea.vmem [#allocation2], %s220
        // Predicated region
        $region37: #{_neuralnet_forward.1} parent=35 // pred_check
          %p222 = pneg %p44
        $region38: #{_neuralnet_forward.1} parent=35 // pred_check_branch
          %224 = sbr.rel (%p222) target = $region40
        $region39: #{_neuralnet_forward.1} parent=35 // pred_region
          %225 = dma.done %s218, 2048
        $region40: #{_neuralnet_forward.1} parent=35 // pred_fallthru
          _
        // Predicated region
        $region41: #{_neuralnet_forward.1} parent=35 // pred_check
          %p226 = pneg %p65
        $region42: #{_neuralnet_forward.1} parent=35 // pred_check_branch
          %228 = sbr.rel (%p226) target = $region44
        $region43: #{_neuralnet_forward.1} parent=35 // pred_region
          %229 = dma.done [#allocation6], 128
        $region44: #{_neuralnet_forward.1} parent=35 // pred_fallthru
          _
        // Predicated region
        $region45: #{_neuralnet_forward.1} parent=35 // pred_check
          %p230 = pneg %p86
        $region46: #{_neuralnet_forward.1} parent=35 // pred_check_branch
          %232 = sbr.rel (%p230) target = $region48
        $region47: #{_neuralnet_forward.1} parent=35 // pred_region
          %233 = dma.done [#allocation6], 1024
        $region48: #{_neuralnet_forward.1} parent=35 // pred_fallthru
          _
        // Predicated region
        $region49: #{_neuralnet_forward.1} parent=35 // pred_check
          %p234 = pneg %p107
        $region50: #{_neuralnet_forward.1} parent=35 // pred_check_branch
          %236 = sbr.rel (%p234) target = $region52
        $region51: #{_neuralnet_forward.1} parent=35 // pred_region
          %237 = dma.done [#allocation9], 1024
        $region52: #{_neuralnet_forward.1} parent=35 // pred_fallthru
          _
        %s238 = sand.u32 %s31, 1
        %s239 = scalar_lea.sflag [#allocation3], %s238
        %s240 = sand.u32 %s31, 1
        %s241 = smul.addr %s240, 128
        %s242 = scalar_lea.vmem [#allocation2], %s241
        %p243 = pneg %p44
        %p244 = pneg %p41
        %p245 = pneg %p65
        %p246 = pneg %p62
        %p247 = pneg %p86
        %p248 = pneg %p83
        %p249 = pneg %p107
        %p250 = pneg %p104
        %p251 = pneg %p133
        %p252 = pneg %p130
        %s253 = sand.u32 %s120, 1
        %s254 = scalar_lea.sflag [#allocation4], %s253
        %s255 = sand.u32 %s120, 1
        %s256 = smul.addr %s255, 128
        %s257 = scalar_lea.vmem [#allocation10], %s256
        %s258 = smul.u32 16, %s23
        %s259 = smul.u32 16, %s23
        %v261 = vld [vmem:[%s221] sm:$0xff]
        %v262 = vld [vmem:[%s221 + $0x8] sm:$0xff]
        %v263 = vld [vmem:[%s221 + $0x10] sm:$0xff]
        %v264 = vld [vmem:[%s221 + $0x18] sm:$0xff]
        %v265 = vld [vmem:[%s221 + $0x20] sm:$0xff]
        %v266 = vld [vmem:[%s221 + $0x28] sm:$0xff]
        %v267 = vld [vmem:[%s221 + $0x30] sm:$0xff]
        %v268 = vld [vmem:[%s221 + $0x38] sm:$0xff]
        %v269 = vld [vmem:[%s221 + $0x40] sm:$0xff]
        %v270 = vld [vmem:[%s221 + $0x48] sm:$0xff]
        %v271 = vld [vmem:[%s221 + $0x50] sm:$0xff]
        %v272 = vld [vmem:[%s221 + $0x58] sm:$0xff]
        %v273 = vld [vmem:[%s221 + $0x60] sm:$0xff]
        %v274 = vld [vmem:[%s221 + $0x68] sm:$0xff]
        %v275 = vld [vmem:[%s221 + $0x70] sm:$0xff]
        %v276 = vld [vmem:[%s221 + $0x78] sm:$0xff]
        %v277 = vld [vmem:[#allocation5] sm:$0xff]
        %278 = vadd.xlane.f32.xlu0 %v261
        %v279 = vpop.xlane.xlu0 %278
        %280 = vadd.xlane.f32.xlu0 %v262
        %v281 = vpop.xlane.xlu0 %280
        %282 = vadd.xlane.f32.xlu0 %v263
        %v283 = vpop.xlane.xlu0 %282
        %284 = vadd.xlane.f32.xlu0 %v264
        %v285 = vpop.xlane.xlu0 %284
        %286 = vadd.xlane.f32.xlu0 %v265
        %v287 = vpop.xlane.xlu0 %286
        %288 = vadd.xlane.f32.xlu0 %v266
        %v289 = vpop.xlane.xlu0 %288
        %290 = vadd.xlane.f32.xlu0 %v267
        %v291 = vpop.xlane.xlu0 %290
        %292 = vadd.xlane.f32.xlu0 %v268
        %v293 = vpop.xlane.xlu0 %292
        %294 = vadd.xlane.f32.xlu0 %v269
        %v295 = vpop.xlane.xlu0 %294
        %296 = vadd.xlane.f32.xlu0 %v270
        %v297 = vpop.xlane.xlu0 %296
        %298 = vadd.xlane.f32.xlu0 %v271
        %v299 = vpop.xlane.xlu0 %298
        %300 = vadd.xlane.f32.xlu0 %v272
        %v301 = vpop.xlane.xlu0 %300
        %302 = vadd.xlane.f32.xlu0 %v273
        %v303 = vpop.xlane.xlu0 %302
        %304 = vadd.xlane.f32.xlu0 %v274
        %v305 = vpop.xlane.xlu0 %304
        %306 = vadd.xlane.f32.xlu0 %v275
        %v307 = vpop.xlane.xlu0 %306
        %308 = vadd.xlane.f32.xlu0 %v276
        %v309 = vpop.xlane.xlu0 %308
        %v310 = vmul.f32 %v261, %v261
        %v311 = vmul.f32 %v262, %v262
        %v312 = vmul.f32 %v263, %v263
        %v313 = vmul.f32 %v264, %v264
        %v314 = vmul.f32 %v265, %v265
        %v315 = vmul.f32 %v266, %v266
        %v316 = vmul.f32 %v267, %v267
        %v317 = vmul.f32 %v268, %v268
        %v318 = vmul.f32 %v269, %v269
        %v319 = vmul.f32 %v270, %v270
        %v320 = vmul.f32 %v271, %v271
        %v321 = vmul.f32 %v272, %v272
        %v322 = vmul.f32 %v273, %v273
        %v323 = vmul.f32 %v274, %v274
        %v324 = vmul.f32 %v275, %v275
        %v325 = vmul.f32 %v276, %v276
        %326 = vadd.xlane.f32.xlu0 %v310
        %v327 = vpop.xlane.xlu0 %326
        %328 = vadd.xlane.f32.xlu0 %v311
        %v329 = vpop.xlane.xlu0 %328
        %330 = vadd.xlane.f32.xlu0 %v312
        %v331 = vpop.xlane.xlu0 %330
        %332 = vadd.xlane.f32.xlu0 %v313
        %v333 = vpop.xlane.xlu0 %332
        %334 = vadd.xlane.f32.xlu0 %v314
        %v335 = vpop.xlane.xlu0 %334
        %336 = vadd.xlane.f32.xlu0 %v315
        %v337 = vpop.xlane.xlu0 %336
        %338 = vadd.xlane.f32.xlu0 %v316
        %v339 = vpop.xlane.xlu0 %338
        %340 = vadd.xlane.f32.xlu0 %v317
        %v341 = vpop.xlane.xlu0 %340
        %342 = vadd.xlane.f32.xlu0 %v318
        %v343 = vpop.xlane.xlu0 %342
        %344 = vadd.xlane.f32.xlu0 %v319
        %v345 = vpop.xlane.xlu0 %344
        %346 = vadd.xlane.f32.xlu0 %v320
        %v347 = vpop.xlane.xlu0 %346
        %348 = vadd.xlane.f32.xlu0 %v321
        %v349 = vpop.xlane.xlu0 %348
        %350 = vadd.xlane.f32.xlu0 %v322
        %v351 = vpop.xlane.xlu0 %350
        %352 = vadd.xlane.f32.xlu0 %v323
        %v353 = vpop.xlane.xlu0 %352
        %354 = vadd.xlane.f32.xlu0 %v324
        %v355 = vpop.xlane.xlu0 %354
        %356 = vadd.xlane.f32.xlu0 %v325
        %v357 = vpop.xlane.xlu0 %356
        %v358 = vmul.f32 %v279, 0.0078125
        %v359 = vmul.f32 %v281, 0.0078125
        %v360 = vmul.f32 %v283, 0.0078125
        %v361 = vmul.f32 %v285, 0.0078125
        %v362 = vmul.f32 %v287, 0.0078125
        %v363 = vmul.f32 %v289, 0.0078125
        %v364 = vmul.f32 %v291, 0.0078125
        %v365 = vmul.f32 %v293, 0.0078125
        %v366 = vmul.f32 %v295, 0.0078125
        %v367 = vmul.f32 %v297, 0.0078125
        %v368 = vmul.f32 %v299, 0.0078125
        %v369 = vmul.f32 %v301, 0.0078125
        %v370 = vmul.f32 %v303, 0.0078125
        %v371 = vmul.f32 %v305, 0.0078125
        %v372 = vmul.f32 %v307, 0.0078125
        %v373 = vmul.f32 %v309, 0.0078125
        %v374 = vmul.f32 %v327, 0.0078125
        %v375 = vmul.f32 %v329, 0.0078125
        %v376 = vmul.f32 %v331, 0.0078125
        %v377 = vmul.f32 %v333, 0.0078125
        %v378 = vmul.f32 %v335, 0.0078125
        %v379 = vmul.f32 %v337, 0.0078125
        %v380 = vmul.f32 %v339, 0.0078125
        %v381 = vmul.f32 %v341, 0.0078125
        %v382 = vmul.f32 %v343, 0.0078125
        %v383 = vmul.f32 %v345, 0.0078125
        %v384 = vmul.f32 %v347, 0.0078125
        %v385 = vmul.f32 %v349, 0.0078125
        %v386 = vmul.f32 %v351, 0.0078125
        %v387 = vmul.f32 %v353, 0.0078125
        %v388 = vmul.f32 %v355, 0.0078125
        %v389 = vmul.f32 %v357, 0.0078125
        %v390 = vmul.f32 %v358, %v358
        %v391 = vmul.f32 %v359, %v359
        %v392 = vmul.f32 %v360, %v360
        %v393 = vmul.f32 %v361, %v361
        %v394 = vmul.f32 %v362, %v362
        %v395 = vmul.f32 %v363, %v363
        %v396 = vmul.f32 %v364, %v364
        %v397 = vmul.f32 %v365, %v365
        %v398 = vmul.f32 %v366, %v366
        %v399 = vmul.f32 %v367, %v367
        %v400 = vmul.f32 %v368, %v368
        %v401 = vmul.f32 %v369, %v369
        %v402 = vmul.f32 %v370, %v370
        %v403 = vmul.f32 %v371, %v371
        %v404 = vmul.f32 %v372, %v372
        %v405 = vmul.f32 %v373, %v373
        %v406 = vsub.f32 %v374, %v390
        %v407 = vsub.f32 %v375, %v391
        %v408 = vsub.f32 %v376, %v392
        %v409 = vsub.f32 %v377, %v393
        %v410 = vsub.f32 %v378, %v394
        %v411 = vsub.f32 %v379, %v395
        %v412 = vsub.f32 %v380, %v396
        %v413 = vsub.f32 %v381, %v397
        %v414 = vsub.f32 %v382, %v398
        %v415 = vsub.f32 %v383, %v399
        %v416 = vsub.f32 %v384, %v400
        %v417 = vsub.f32 %v385, %v401
        %v418 = vsub.f32 %v386, %v402
        %v419 = vsub.f32 %v387, %v403
        %v420 = vsub.f32 %v388, %v404
        %v421 = vsub.f32 %v389, %v405
        %v422 = vmax.f32 %v406, 0.0
        %v423 = vmax.f32 %v407, 0.0
        %v424 = vmax.f32 %v408, 0.0
        %v425 = vmax.f32 %v409, 0.0
        %v426 = vmax.f32 %v410, 0.0
        %v427 = vmax.f32 %v411, 0.0
        %v428 = vmax.f32 %v412, 0.0
        %v429 = vmax.f32 %v413, 0.0
        %v430 = vmax.f32 %v414, 0.0
        %v431 = vmax.f32 %v415, 0.0
        %v432 = vmax.f32 %v416, 0.0
        %v433 = vmax.f32 %v417, 0.0
        %v434 = vmax.f32 %v418, 0.0
        %v435 = vmax.f32 %v419, 0.0
        %v436 = vmax.f32 %v420, 0.0
        %v437 = vmax.f32 %v421, 0.0
        %v438 = vsub.f32 %v261, %v358
        %v439 = vsub.f32 %v262, %v359
        %v440 = vsub.f32 %v263, %v360
        %v441 = vsub.f32 %v264, %v361
        %v442 = vsub.f32 %v265, %v362
        %v443 = vsub.f32 %v266, %v363
        %v444 = vsub.f32 %v267, %v364
        %v445 = vsub.f32 %v268, %v365
        %v446 = vsub.f32 %v269, %v366
        %v447 = vsub.f32 %v270, %v367
        %v448 = vsub.f32 %v271, %v368
        %v449 = vsub.f32 %v272, %v369
        %v450 = vsub.f32 %v273, %v370
        %v451 = vsub.f32 %v274, %v371
        %v452 = vsub.f32 %v275, %v372
        %v453 = vsub.f32 %v276, %v373
        %v454 = vadd.f32 %v422, 1e-05
        %v455 = vadd.f32 %v423, 1e-05
        %v456 = vadd.f32 %v424, 1e-05
        %v457 = vadd.f32 %v425, 1e-05
        %v458 = vadd.f32 %v426, 1e-05
        %v459 = vadd.f32 %v427, 1e-05
        %v460 = vadd.f32 %v428, 1e-05
        %v461 = vadd.f32 %v429, 1e-05
        %v462 = vadd.f32 %v430, 1e-05
        %v463 = vadd.f32 %v431, 1e-05
        %v464 = vadd.f32 %v432, 1e-05
        %v465 = vadd.f32 %v433, 1e-05
        %v466 = vadd.f32 %v434, 1e-05
        %v467 = vadd.f32 %v435, 1e-05
        %v468 = vadd.f32 %v436, 1e-05
        %v469 = vadd.f32 %v437, 1e-05
        %v470 = vrsqrt.pop %v454
        %v471 = vrsqrt.pop %v455
        %v472 = vrsqrt.pop %v456
        %v473 = vrsqrt.pop %v457
        %v474 = vrsqrt.pop %v458
        %v475 = vrsqrt.pop %v459
        %v476 = vrsqrt.pop %v460
        %v477 = vrsqrt.pop %v461
        %v478 = vrsqrt.pop %v462
        %v479 = vrsqrt.pop %v463
        %v480 = vrsqrt.pop %v464
        %v481 = vrsqrt.pop %v465
        %v482 = vrsqrt.pop %v466
        %v483 = vrsqrt.pop %v467
        %v484 = vrsqrt.pop %v468
        %v485 = vrsqrt.pop %v469
        %v486 = vmul.f32 %v438, %v470
        %v487 = vmul.f32 %v439, %v471
        %v488 = vmul.f32 %v440, %v472
        %v489 = vmul.f32 %v441, %v473
        %v490 = vmul.f32 %v442, %v474
        %v491 = vmul.f32 %v443, %v475
        %v492 = vmul.f32 %v444, %v476
        %v493 = vmul.f32 %v445, %v477
        %v494 = vmul.f32 %v446, %v478
        %v495 = vmul.f32 %v447, %v479
        %v496 = vmul.f32 %v448, %v480
        %v497 = vmul.f32 %v449, %v481
        %v498 = vmul.f32 %v450, %v482
        %v499 = vmul.f32 %v451, %v483
        %v500 = vmul.f32 %v452, %v484
        %v501 = vmul.f32 %v453, %v485
        %v502 = vlaneseq
        %v503 = vshrl.u32 %v502, 7
        %v504 = vsub.s32 0, %v503
        %v505 = vrot.slane %v277, %v504
        %v506 = vmul.f32 %v486, %v505
        %v507 = vmul.f32 %v487, %v505
        %v508 = vmul.f32 %v488, %v505
        %v509 = vmul.f32 %v489, %v505
        %v510 = vmul.f32 %v490, %v505
        %v511 = vmul.f32 %v491, %v505
        %v512 = vmul.f32 %v492, %v505
        %v513 = vmul.f32 %v493, %v505
        %v514 = vmul.f32 %v494, %v505
        %v515 = vmul.f32 %v495, %v505
        %v516 = vmul.f32 %v496, %v505
        %v517 = vmul.f32 %v497, %v505
        %v518 = vmul.f32 %v498, %v505
        %v519 = vmul.f32 %v499, %v505
        %v520 = vmul.f32 %v500, %v505
        %v521 = vmul.f32 %v501, %v505
        %v522 = vlaneseq
        %v523 = vshrl.u32 %v522, 7
        %v524 = vsub.s32 1, %v523
        %v525 = vrot.slane %v277, %v524
        %v526 = vadd.f32 %v506, %v525
        %v527 = vadd.f32 %v507, %v525
        %v528 = vadd.f32 %v508, %v525
        %v529 = vadd.f32 %v509, %v525
        %v530 = vadd.f32 %v510, %v525
        %v531 = vadd.f32 %v511, %v525
        %v532 = vadd.f32 %v512, %v525
        %v533 = vadd.f32 %v513, %v525
        %v534 = vadd.f32 %v514, %v525
        %v535 = vadd.f32 %v515, %v525
        %v536 = vadd.f32 %v516, %v525
        %v537 = vadd.f32 %v517, %v525
        %v538 = vadd.f32 %v518, %v525
        %v539 = vadd.f32 %v519, %v525
        %v540 = vadd.f32 %v520, %v525
        %v541 = vadd.f32 %v521, %v525
        %v542 = vpack.c.bf16 %v527, %v526
        %v543 = vpack.c.bf16 %v529, %v528
        %v544 = vpack.c.bf16 %v531, %v530
        %v545 = vpack.c.bf16 %v533, %v532
        %v546 = vpack.c.bf16 %v535, %v534
        %v547 = vpack.c.bf16 %v537, %v536
        %v548 = vpack.c.bf16 %v539, %v538
        %v549 = vpack.c.bf16 %v541, %v540
        %v550 = vld [vmem:[#allocation7] sm:$0xf]
        %v551 = vld [vmem:[#allocation7 + $0x4] sm:$0xf]
        %v552 = vld [vmem:[#allocation7 + $0x8] sm:$0xf]
        %v553 = vld [vmem:[#allocation7 + $0xc] sm:$0xf]
        %v554 = vld [vmem:[#allocation7 + $0x10] sm:$0xf]
        %v555 = vld [vmem:[#allocation7 + $0x14] sm:$0xf]
        %v556 = vld [vmem:[#allocation7 + $0x18] sm:$0xf]
        %v557 = vld [vmem:[#allocation7 + $0x1c] sm:$0xf]
        %v558 = vld [vmem:[#allocation7 + $0x20] sm:$0xf]
        %v559 = vld [vmem:[#allocation7 + $0x24] sm:$0xf]
        %v560 = vld [vmem:[#allocation7 + $0x28] sm:$0xf]
        %v561 = vld [vmem:[#allocation7 + $0x2c] sm:$0xf]
        %v562 = vld [vmem:[#allocation7 + $0x30] sm:$0xf]
        %v563 = vld [vmem:[#allocation7 + $0x34] sm:$0xf]
        %v564 = vld [vmem:[#allocation7 + $0x38] sm:$0xf]
        %v565 = vld [vmem:[#allocation7 + $0x3c] sm:$0xf]
        %v566 = vlaneseq
        %v567 = vshrl.u32 %v566, 7
        %v568 = vsub.s32 2, %v567
        %v569 = vrot.slane %v277, %v568
        %v586 = vunpack.c.l.b16 %v550
        %v587 = vunpack.c.l.b16 %v551
        %v588 = vunpack.c.l.b16 %v552
        %v589 = vunpack.c.l.b16 %v553
        %v590 = vunpack.c.l.b16 %v554
        %v591 = vunpack.c.l.b16 %v555
        %v592 = vunpack.c.l.b16 %v556
        %v593 = vunpack.c.l.b16 %v557
        %v594 = vunpack.c.l.b16 %v558
        %v595 = vunpack.c.l.b16 %v559
        %v596 = vunpack.c.l.b16 %v560
        %v597 = vunpack.c.l.b16 %v561
        %v598 = vunpack.c.l.b16 %v562
        %v599 = vunpack.c.l.b16 %v563
        %v600 = vunpack.c.l.b16 %v564
        %v601 = vunpack.c.l.b16 %v565
        %v602 = vpack.c.b16 %v587, %v586
        %v603 = vpack.c.b16 %v589, %v588
        %v604 = vpack.c.b16 %v591, %v590
        %v605 = vpack.c.b16 %v593, %v592
        %v606 = vpack.c.b16 %v595, %v594
        %v607 = vpack.c.b16 %v597, %v596
        %v608 = vpack.c.b16 %v599, %v598
        %v609 = vpack.c.b16 %v601, %v600
        %618 = vmatprep.subr.bf16.mxu0 0
        %619 = vmatpush1.bf16.msra.mxu0 %v602
        %620 = vmatprep.subr.bf16.mxu0 0
        %621 = vmatpush1.bf16.msra.mxu0 %v603
        %622 = vmatprep.subr.bf16.mxu0 0
        %623 = vmatpush1.bf16.msra.mxu0 %v604
        %624 = vmatprep.subr.bf16.mxu0 0
        %625 = vmatpush1.bf16.msra.mxu0 %v605
        %626 = vmatprep.subr.bf16.mxu0 0
        %627 = vmatpush1.bf16.msra.mxu0 %v606
        %628 = vmatprep.subr.bf16.mxu0 0
        %629 = vmatpush1.bf16.msra.mxu0 %v607
        %630 = vmatprep.subr.bf16.mxu0 0
        %631 = vmatpush1.bf16.msra.mxu0 %v608
        %632 = vmatprep.subr.bf16.mxu0 0
        %633 = vmatpush1.bf16.msra.mxu0 %v609
        %634 = vmatprep.subr.bf16.mxu0 0
        %635 = vmatpush1.bf16.msra.mxu0 0
        %636 = vmatprep.subr.bf16.mxu0 0
        %637 = vmatpush1.bf16.msra.mxu0 0
        %638 = vmatprep.subr.bf16.mxu0 0
        %639 = vmatpush1.bf16.msra.mxu0 0
        %640 = vmatprep.subr.bf16.mxu0 0
        %641 = vmatpush1.bf16.msra.mxu0 0
        %642 = vmatprep.subr.bf16.mxu0 0
        %643 = vmatpush1.bf16.msra.mxu0 0
        %644 = vmatprep.subr.bf16.mxu0 0
        %645 = vmatpush1.bf16.msra.mxu0 0
        %646 = vmatprep.subr.bf16.mxu0 0
        %647 = vmatpush1.bf16.msra.mxu0 0
        %648 = vmatprep.subr.bf16.mxu0 0
        %649 = vmatpush1.bf16.msra.mxu0 0
        %650 = vmatprep.mubr.bf16.mxu0 0
        %651 = vmatmul.mubr.bf16.gmra.mrb[0].mxu0 %v542
        %v652 = vpop.f32.mrb[0].mxu0
        %v653 = vadd.f32 %v569, %v652
        %v654 = vpop.f32.mrb[0].mxu0
        %v655 = vpop.f32.mrb[0].mxu0
        %v656 = vadd.f32 %v569, %v655
        %v657 = vpop.f32.mrb[0].mxu0
        %658 = vmatprep.mubr.bf16.mxu0 0
        %659 = vmatmul.mubr.bf16.gmra.mrb[0].mxu0 %v543
        %v660 = vpop.f32.mrb[0].mxu0
        %v661 = vadd.f32 %v569, %v660
        %v662 = vpop.f32.mrb[0].mxu0
        %v663 = vpop.f32.mrb[0].mxu0
        %v664 = vadd.f32 %v569, %v663
        %v665 = vpop.f32.mrb[0].mxu0
        %666 = vmatprep.mubr.bf16.mxu0 0
        %667 = vmatmul.mubr.bf16.gmra.mrb[0].mxu0 %v544
        %v668 = vpop.f32.mrb[0].mxu0
        %v669 = vadd.f32 %v569, %v668
        %v670 = vpop.f32.mrb[0].mxu0
        %v671 = vpop.f32.mrb[0].mxu0
        %v672 = vadd.f32 %v569, %v671
        %v673 = vpop.f32.mrb[0].mxu0
        %674 = vmatprep.mubr.bf16.mxu0 0
        %675 = vmatmul.mubr.bf16.gmra.mrb[0].mxu0 %v545
        %v676 = vpop.f32.mrb[0].mxu0
        %v677 = vadd.f32 %v569, %v676
        %v678 = vpop.f32.mrb[0].mxu0
        %v679 = vpop.f32.mrb[0].mxu0
        %v680 = vadd.f32 %v569, %v679
        %v681 = vpop.f32.mrb[0].mxu0
        %682 = vmatprep.mubr.bf16.mxu0 0
        %683 = vmatmul.mubr.bf16.gmra.mrb[0].mxu0 %v546
        %v684 = vpop.f32.mrb[0].mxu0
        %v685 = vadd.f32 %v569, %v684
        %v686 = vpop.f32.mrb[0].mxu0
        %v687 = vpop.f32.mrb[0].mxu0
        %v688 = vadd.f32 %v569, %v687
        %v689 = vpop.f32.mrb[0].mxu0
        %690 = vmatprep.mubr.bf16.mxu0 0
        %691 = vmatmul.mubr.bf16.gmra.mrb[0].mxu0 %v547
        %v692 = vpop.f32.mrb[0].mxu0
        %v693 = vadd.f32 %v569, %v692
        %v694 = vpop.f32.mrb[0].mxu0
        %v695 = vpop.f32.mrb[0].mxu0
        %v696 = vadd.f32 %v569, %v695
        %v697 = vpop.f32.mrb[0].mxu0
        %698 = vmatprep.mubr.bf16.mxu0 0
        %699 = vmatmul.mubr.bf16.gmra.mrb[0].mxu0 %v548
        %v700 = vpop.f32.mrb[0].mxu0
        %v701 = vadd.f32 %v569, %v700
        %v702 = vpop.f32.mrb[0].mxu0
        %v703 = vpop.f32.mrb[0].mxu0
        %v704 = vadd.f32 %v569, %v703
        %v705 = vpop.f32.mrb[0].mxu0
        %706 = vmatprep.mubr.bf16.mxu0 0
        %707 = vmatmul.mubr.bf16.gmra.mrb[0].mxu0 %v549
        %v708 = vpop.f32.mrb[0].mxu0
        %v709 = vadd.f32 %v569, %v708
        %v710 = vpop.f32.mrb[0].mxu0
        %v711 = vpop.f32.mrb[0].mxu0
        %v712 = vadd.f32 %v569, %v711
        %v713 = vpop.f32.mrb[0].mxu0
        %714 = vdwg.mxu0
        %v715 = vmax.f32 %v653, 0.0
        %v716 = vmax.f32 %v656, 0.0
        %v717 = vmax.f32 %v661, 0.0
        %v718 = vmax.f32 %v664, 0.0
        %v719 = vmax.f32 %v669, 0.0
        %v720 = vmax.f32 %v672, 0.0
        %v721 = vmax.f32 %v677, 0.0
        %v722 = vmax.f32 %v680, 0.0
        %v723 = vmax.f32 %v685, 0.0
        %v724 = vmax.f32 %v688, 0.0
        %v725 = vmax.f32 %v693, 0.0
        %v726 = vmax.f32 %v696, 0.0
        %v727 = vmax.f32 %v701, 0.0
        %v728 = vmax.f32 %v704, 0.0
        %v729 = vmax.f32 %v709, 0.0
        %v730 = vmax.f32 %v712, 0.0
        %731 = vadd.xlane.f32.xlu0 %v715
        %v732 = vpop.xlane.xlu0 %731
        %733 = vadd.xlane.f32.xlu0 %v716
        %v734 = vpop.xlane.xlu0 %733
        %735 = vadd.xlane.f32.xlu0 %v717
        %v736 = vpop.xlane.xlu0 %735
        %737 = vadd.xlane.f32.xlu0 %v718
        %v738 = vpop.xlane.xlu0 %737
        %739 = vadd.xlane.f32.xlu0 %v719
        %v740 = vpop.xlane.xlu0 %739
        %741 = vadd.xlane.f32.xlu0 %v720
        %v742 = vpop.xlane.xlu0 %741
        %743 = vadd.xlane.f32.xlu0 %v721
        %v744 = vpop.xlane.xlu0 %743
        %745 = vadd.xlane.f32.xlu0 %v722
        %v746 = vpop.xlane.xlu0 %745
        %747 = vadd.xlane.f32.xlu0 %v723
        %v748 = vpop.xlane.xlu0 %747
        %749 = vadd.xlane.f32.xlu0 %v724
        %v750 = vpop.xlane.xlu0 %749
        %751 = vadd.xlane.f32.xlu0 %v725
        %v752 = vpop.xlane.xlu0 %751
        %753 = vadd.xlane.f32.xlu0 %v726
        %v754 = vpop.xlane.xlu0 %753
        %755 = vadd.xlane.f32.xlu0 %v727
        %v756 = vpop.xlane.xlu0 %755
        %757 = vadd.xlane.f32.xlu0 %v728
        %v758 = vpop.xlane.xlu0 %757
        %759 = vadd.xlane.f32.xlu0 %v729
        %v760 = vpop.xlane.xlu0 %759
        %761 = vadd.xlane.f32.xlu0 %v730
        %v762 = vpop.xlane.xlu0 %761
        %v763 = vmul.f32 %v715, %v715
        %v764 = vmul.f32 %v716, %v716
        %v765 = vmul.f32 %v717, %v717
        %v766 = vmul.f32 %v718, %v718
        %v767 = vmul.f32 %v719, %v719
        %v768 = vmul.f32 %v720, %v720
        %v769 = vmul.f32 %v721, %v721
        %v770 = vmul.f32 %v722, %v722
        %v771 = vmul.f32 %v723, %v723
        %v772 = vmul.f32 %v724, %v724
        %v773 = vmul.f32 %v725, %v725
        %v774 = vmul.f32 %v726, %v726
        %v775 = vmul.f32 %v727, %v727
        %v776 = vmul.f32 %v728, %v728
        %v777 = vmul.f32 %v729, %v729
        %v778 = vmul.f32 %v730, %v730
        %779 = vadd.xlane.f32.xlu0 %v763
        %v780 = vpop.xlane.xlu0 %779
        %781 = vadd.xlane.f32.xlu0 %v764
        %v782 = vpop.xlane.xlu0 %781
        %783 = vadd.xlane.f32.xlu0 %v765
        %v784 = vpop.xlane.xlu0 %783
        %785 = vadd.xlane.f32.xlu0 %v766
        %v786 = vpop.xlane.xlu0 %785
        %787 = vadd.xlane.f32.xlu0 %v767
        %v788 = vpop.xlane.xlu0 %787
        %789 = vadd.xlane.f32.xlu0 %v768
        %v790 = vpop.xlane.xlu0 %789
        %791 = vadd.xlane.f32.xlu0 %v769
        %v792 = vpop.xlane.xlu0 %791
        %793 = vadd.xlane.f32.xlu0 %v770
        %v794 = vpop.xlane.xlu0 %793
        %795 = vadd.xlane.f32.xlu0 %v771
        %v796 = vpop.xlane.xlu0 %795
        %797 = vadd.xlane.f32.xlu0 %v772
        %v798 = vpop.xlane.xlu0 %797
        %799 = vadd.xlane.f32.xlu0 %v773
        %v800 = vpop.xlane.xlu0 %799
        %801 = vadd.xlane.f32.xlu0 %v774
        %v802 = vpop.xlane.xlu0 %801
        %803 = vadd.xlane.f32.xlu0 %v775
        %v804 = vpop.xlane.xlu0 %803
        %805 = vadd.xlane.f32.xlu0 %v776
        %v806 = vpop.xlane.xlu0 %805
        %807 = vadd.xlane.f32.xlu0 %v777
        %v808 = vpop.xlane.xlu0 %807
        %809 = vadd.xlane.f32.xlu0 %v778
        %v810 = vpop.xlane.xlu0 %809
        %v811 = vmul.f32 %v732, 0.0078125
        %v812 = vmul.f32 %v734, 0.0078125
        %v813 = vmul.f32 %v736, 0.0078125
        %v814 = vmul.f32 %v738, 0.0078125
        %v815 = vmul.f32 %v740, 0.0078125
        %v816 = vmul.f32 %v742, 0.0078125
        %v817 = vmul.f32 %v744, 0.0078125
        %v818 = vmul.f32 %v746, 0.0078125
        %v819 = vmul.f32 %v748, 0.0078125
        %v820 = vmul.f32 %v750, 0.0078125
        %v821 = vmul.f32 %v752, 0.0078125
        %v822 = vmul.f32 %v754, 0.0078125
        %v823 = vmul.f32 %v756, 0.0078125
        %v824 = vmul.f32 %v758, 0.0078125
        %v825 = vmul.f32 %v760, 0.0078125
        %v826 = vmul.f32 %v762, 0.0078125
        %v827 = vmul.f32 %v780, 0.0078125
        %v828 = vmul.f32 %v782, 0.0078125
        %v829 = vmul.f32 %v784, 0.0078125
        %v830 = vmul.f32 %v786, 0.0078125
        %v831 = vmul.f32 %v788, 0.0078125
        %v832 = vmul.f32 %v790, 0.0078125
        %v833 = vmul.f32 %v792, 0.0078125
        %v834 = vmul.f32 %v794, 0.0078125
        %v835 = vmul.f32 %v796, 0.0078125
        %v836 = vmul.f32 %v798, 0.0078125
        %v837 = vmul.f32 %v800, 0.0078125
        %v838 = vmul.f32 %v802, 0.0078125
        %v839 = vmul.f32 %v804, 0.0078125
        %v840 = vmul.f32 %v806, 0.0078125
        %v841 = vmul.f32 %v808, 0.0078125
        %v842 = vmul.f32 %v810, 0.0078125
        %v843 = vmul.f32 %v811, %v811
        %v844 = vmul.f32 %v812, %v812
        %v845 = vmul.f32 %v813, %v813
        %v846 = vmul.f32 %v814, %v814
        %v847 = vmul.f32 %v815, %v815
        %v848 = vmul.f32 %v816, %v816
        %v849 = vmul.f32 %v817, %v817
        %v850 = vmul.f32 %v818, %v818
        %v851 = vmul.f32 %v819, %v819
        %v852 = vmul.f32 %v820, %v820
        %v853 = vmul.f32 %v821, %v821
        %v854 = vmul.f32 %v822, %v822
        %v855 = vmul.f32 %v823, %v823
        %v856 = vmul.f32 %v824, %v824
        %v857 = vmul.f32 %v825, %v825
        %v858 = vmul.f32 %v826, %v826
        %v859 = vsub.f32 %v827, %v843
        %v860 = vsub.f32 %v828, %v844
        %v861 = vsub.f32 %v829, %v845
        %v862 = vsub.f32 %v830, %v846
        %v863 = vsub.f32 %v831, %v847
        %v864 = vsub.f32 %v832, %v848
        %v865 = vsub.f32 %v833, %v849
        %v866 = vsub.f32 %v834, %v850
        %v867 = vsub.f32 %v835, %v851
        %v868 = vsub.f32 %v836, %v852
        %v869 = vsub.f32 %v837, %v853
        %v870 = vsub.f32 %v838, %v854
        %v871 = vsub.f32 %v839, %v855
        %v872 = vsub.f32 %v840, %v856
        %v873 = vsub.f32 %v841, %v857
        %v874 = vsub.f32 %v842, %v858
        %v875 = vmax.f32 %v859, 0.0
        %v876 = vmax.f32 %v860, 0.0
        %v877 = vmax.f32 %v861, 0.0
        %v878 = vmax.f32 %v862, 0.0
        %v879 = vmax.f32 %v863, 0.0
        %v880 = vmax.f32 %v864, 0.0
        %v881 = vmax.f32 %v865, 0.0
        %v882 = vmax.f32 %v866, 0.0
        %v883 = vmax.f32 %v867, 0.0
        %v884 = vmax.f32 %v868, 0.0
        %v885 = vmax.f32 %v869, 0.0
        %v886 = vmax.f32 %v870, 0.0
        %v887 = vmax.f32 %v871, 0.0
        %v888 = vmax.f32 %v872, 0.0
        %v889 = vmax.f32 %v873, 0.0
        %v890 = vmax.f32 %v874, 0.0
        %v891 = vsub.f32 %v715, %v811
        %v892 = vsub.f32 %v716, %v812
        %v893 = vsub.f32 %v717, %v813
        %v894 = vsub.f32 %v718, %v814
        %v895 = vsub.f32 %v719, %v815
        %v896 = vsub.f32 %v720, %v816
        %v897 = vsub.f32 %v721, %v817
        %v898 = vsub.f32 %v722, %v818
        %v899 = vsub.f32 %v723, %v819
        %v900 = vsub.f32 %v724, %v820
        %v901 = vsub.f32 %v725, %v821
        %v902 = vsub.f32 %v726, %v822
        %v903 = vsub.f32 %v727, %v823
        %v904 = vsub.f32 %v728, %v824
        %v905 = vsub.f32 %v729, %v825
        %v906 = vsub.f32 %v730, %v826
        %v907 = vadd.f32 %v875, 1e-05
        %v908 = vadd.f32 %v876, 1e-05
        %v909 = vadd.f32 %v877, 1e-05
        %v910 = vadd.f32 %v878, 1e-05
        %v911 = vadd.f32 %v879, 1e-05
        %v912 = vadd.f32 %v880, 1e-05
        %v913 = vadd.f32 %v881, 1e-05
        %v914 = vadd.f32 %v882, 1e-05
        %v915 = vadd.f32 %v883, 1e-05
        %v916 = vadd.f32 %v884, 1e-05
        %v917 = vadd.f32 %v885, 1e-05
        %v918 = vadd.f32 %v886, 1e-05
        %v919 = vadd.f32 %v887, 1e-05
        %v920 = vadd.f32 %v888, 1e-05
        %v921 = vadd.f32 %v889, 1e-05
        %v922 = vadd.f32 %v890, 1e-05
        %v923 = vrsqrt.pop %v907
        %v924 = vrsqrt.pop %v908
        %v925 = vrsqrt.pop %v909
        %v926 = vrsqrt.pop %v910
        %v927 = vrsqrt.pop %v911
        %v928 = vrsqrt.pop %v912
        %v929 = vrsqrt.pop %v913
        %v930 = vrsqrt.pop %v914
        %v931 = vrsqrt.pop %v915
        %v932 = vrsqrt.pop %v916
        %v933 = vrsqrt.pop %v917
        %v934 = vrsqrt.pop %v918
        %v935 = vrsqrt.pop %v919
        %v936 = vrsqrt.pop %v920
        %v937 = vrsqrt.pop %v921
        %v938 = vrsqrt.pop %v922
        %v939 = vmul.f32 %v891, %v923
        %v940 = vmul.f32 %v892, %v924
        %v941 = vmul.f32 %v893, %v925
        %v942 = vmul.f32 %v894, %v926
        %v943 = vmul.f32 %v895, %v927
        %v944 = vmul.f32 %v896, %v928
        %v945 = vmul.f32 %v897, %v929
        %v946 = vmul.f32 %v898, %v930
        %v947 = vmul.f32 %v899, %v931
        %v948 = vmul.f32 %v900, %v932
        %v949 = vmul.f32 %v901, %v933
        %v950 = vmul.f32 %v902, %v934
        %v951 = vmul.f32 %v903, %v935
        %v952 = vmul.f32 %v904, %v936
        %v953 = vmul.f32 %v905, %v937
        %v954 = vmul.f32 %v906, %v938
        %v955 = vlaneseq
        %v956 = vshrl.u32 %v955, 7
        %v957 = vsub.s32 3, %v956
        %v958 = vrot.slane %v277, %v957
        %v959 = vmul.f32 %v939, %v958
        %v960 = vmul.f32 %v940, %v958
        %v961 = vmul.f32 %v941, %v958
        %v962 = vmul.f32 %v942, %v958
        %v963 = vmul.f32 %v943, %v958
        %v964 = vmul.f32 %v944, %v958
        %v965 = vmul.f32 %v945, %v958
        %v966 = vmul.f32 %v946, %v958
        %v967 = vmul.f32 %v947, %v958
        %v968 = vmul.f32 %v948, %v958
        %v969 = vmul.f32 %v949, %v958
        %v970 = vmul.f32 %v950, %v958
        %v971 = vmul.f32 %v951, %v958
        %v972 = vmul.f32 %v952, %v958
        %v973 = vmul.f32 %v953, %v958
        %v974 = vmul.f32 %v954, %v958
        %v975 = vlaneseq
        %v976 = vshrl.u32 %v975, 7
        %v977 = vsub.s32 4, %v976
        %v978 = vrot.slane %v277, %v977
        %v979 = vadd.f32 %v959, %v978
        %v980 = vadd.f32 %v960, %v978
        %v981 = vadd.f32 %v961, %v978
        %v982 = vadd.f32 %v962, %v978
        %v983 = vadd.f32 %v963, %v978
        %v984 = vadd.f32 %v964, %v978
        %v985 = vadd.f32 %v965, %v978
        %v986 = vadd.f32 %v966, %v978
        %v987 = vadd.f32 %v967, %v978
        %v988 = vadd.f32 %v968, %v978
        %v989 = vadd.f32 %v969, %v978
        %v990 = vadd.f32 %v970, %v978
        %v991 = vadd.f32 %v971, %v978
        %v992 = vadd.f32 %v972, %v978
        %v993 = vadd.f32 %v973, %v978
        %v994 = vadd.f32 %v974, %v978
        %v995 = vpack.c.bf16 %v980, %v979
        %v996 = vpack.c.bf16 %v982, %v981
        %v997 = vpack.c.bf16 %v984, %v983
        %v998 = vpack.c.bf16 %v986, %v985
        %v999 = vpack.c.bf16 %v988, %v987
        %v1000 = vpack.c.bf16 %v990, %v989
        %v1001 = vpack.c.bf16 %v992, %v991
        %v1002 = vpack.c.bf16 %v994, %v993
        %v1003 = vld [vmem:[#allocation8] sm:$0xf]
        %v1004 = vld [vmem:[#allocation8 + $0x4] sm:$0xf]
        %v1005 = vld [vmem:[#allocation8 + $0x8] sm:$0xf]
        %v1006 = vld [vmem:[#allocation8 + $0xc] sm:$0xf]
        %v1007 = vld [vmem:[#allocation8 + $0x10] sm:$0xf]
        %v1008 = vld [vmem:[#allocation8 + $0x14] sm:$0xf]
        %v1009 = vld [vmem:[#allocation8 + $0x18] sm:$0xf]
        %v1010 = vld [vmem:[#allocation8 + $0x1c] sm:$0xf]
        %v1011 = vld [vmem:[#allocation8 + $0x20] sm:$0xf]
        %v1012 = vld [vmem:[#allocation8 + $0x24] sm:$0xf]
        %v1013 = vld [vmem:[#allocation8 + $0x28] sm:$0xf]
        %v1014 = vld [vmem:[#allocation8 + $0x2c] sm:$0xf]
        %v1015 = vld [vmem:[#allocation8 + $0x30] sm:$0xf]
        %v1016 = vld [vmem:[#allocation8 + $0x34] sm:$0xf]
        %v1017 = vld [vmem:[#allocation8 + $0x38] sm:$0xf]
        %v1018 = vld [vmem:[#allocation8 + $0x3c] sm:$0xf]
        %v1019 = vlaneseq
        %v1020 = vshrl.u32 %v1019, 7
        %v1021 = vsub.s32 5, %v1020
        %v1022 = vrot.slane %v277, %v1021
        %v1039 = vunpack.c.l.b16 %v1003
        %v1040 = vunpack.c.l.b16 %v1004
        %v1041 = vunpack.c.l.b16 %v1005
        %v1042 = vunpack.c.l.b16 %v1006
        %v1043 = vunpack.c.l.b16 %v1007
        %v1044 = vunpack.c.l.b16 %v1008
        %v1045 = vunpack.c.l.b16 %v1009
        %v1046 = vunpack.c.l.b16 %v1010
        %v1047 = vunpack.c.l.b16 %v1011
        %v1048 = vunpack.c.l.b16 %v1012
        %v1049 = vunpack.c.l.b16 %v1013
        %v1050 = vunpack.c.l.b16 %v1014
        %v1051 = vunpack.c.l.b16 %v1015
        %v1052 = vunpack.c.l.b16 %v1016
        %v1053 = vunpack.c.l.b16 %v1017
        %v1054 = vunpack.c.l.b16 %v1018
        %v1055 = vpack.c.b16 %v1040, %v1039
        %v1056 = vpack.c.b16 %v1042, %v1041
        %v1057 = vpack.c.b16 %v1044, %v1043
        %v1058 = vpack.c.b16 %v1046, %v1045
        %v1059 = vpack.c.b16 %v1048, %v1047
        %v1060 = vpack.c.b16 %v1050, %v1049
        %v1061 = vpack.c.b16 %v1052, %v1051
        %v1062 = vpack.c.b16 %v1054, %v1053
        %1071 = vmatprep.subr.bf16.mxu0 0
        %1072 = vmatpush1.bf16.msra.mxu0 %v1055
        %1073 = vmatprep.subr.bf16.mxu0 0
        %1074 = vmatpush1.bf16.msra.mxu0 %v1056
        %1075 = vmatprep.subr.bf16.mxu0 0
        %1076 = vmatpush1.bf16.msra.mxu0 %v1057
        %1077 = vmatprep.subr.bf16.mxu0 0
        %1078 = vmatpush1.bf16.msra.mxu0 %v1058
        %1079 = vmatprep.subr.bf16.mxu0 0
        %1080 = vmatpush1.bf16.msra.mxu0 %v1059
        %1081 = vmatprep.subr.bf16.mxu0 0
        %1082 = vmatpush1.bf16.msra.mxu0 %v1060
        %1083 = vmatprep.subr.bf16.mxu0 0
        %1084 = vmatpush1.bf16.msra.mxu0 %v1061
        %1085 = vmatprep.subr.bf16.mxu0 0
        %1086 = vmatpush1.bf16.msra.mxu0 %v1062
        %1087 = vmatprep.subr.bf16.mxu0 0
        %1088 = vmatpush1.bf16.msra.mxu0 0
        %1089 = vmatprep.subr.bf16.mxu0 0
        %1090 = vmatpush1.bf16.msra.mxu0 0
        %1091 = vmatprep.subr.bf16.mxu0 0
        %1092 = vmatpush1.bf16.msra.mxu0 0
        %1093 = vmatprep.subr.bf16.mxu0 0
        %1094 = vmatpush1.bf16.msra.mxu0 0
        %1095 = vmatprep.subr.bf16.mxu0 0
        %1096 = vmatpush1.bf16.msra.mxu0 0
        %1097 = vmatprep.subr.bf16.mxu0 0
        %1098 = vmatpush1.bf16.msra.mxu0 0
        %1099 = vmatprep.subr.bf16.mxu0 0
        %1100 = vmatpush1.bf16.msra.mxu0 0
        %1101 = vmatprep.subr.bf16.mxu0 0
        %1102 = vmatpush1.bf16.msra.mxu0 0
        %1103 = vmatprep.mubr.bf16.mxu0 0
        %1104 = vmatmul.mubr.bf16.gmra.mrb[0].mxu0 %v995
        %v1105 = vpop.f32.mrb[0].mxu0
        %v1106 = vadd.f32 %v1022, %v1105
        %v1107 = vpop.f32.mrb[0].mxu0
        %v1108 = vpop.f32.mrb[0].mxu0
        %v1109 = vadd.f32 %v1022, %v1108
        %v1110 = vpop.f32.mrb[0].mxu0
        %1111 = vmatprep.mubr.bf16.mxu0 0
        %1112 = vmatmul.mubr.bf16.gmra.mrb[0].mxu0 %v996
        %v1113 = vpop.f32.mrb[0].mxu0
        %v1114 = vadd.f32 %v1022, %v1113
        %v1115 = vpop.f32.mrb[0].mxu0
        %v1116 = vpop.f32.mrb[0].mxu0
        %v1117 = vadd.f32 %v1022, %v1116
        %v1118 = vpop.f32.mrb[0].mxu0
        %1119 = vmatprep.mubr.bf16.mxu0 0
        %1120 = vmatmul.mubr.bf16.gmra.mrb[0].mxu0 %v997
        %v1121 = vpop.f32.mrb[0].mxu0
        %v1122 = vadd.f32 %v1022, %v1121
        %v1123 = vpop.f32.mrb[0].mxu0
        %v1124 = vpop.f32.mrb[0].mxu0
        %v1125 = vadd.f32 %v1022, %v1124
        %v1126 = vpop.f32.mrb[0].mxu0
        %1127 = vmatprep.mubr.bf16.mxu0 0
        %1128 = vmatmul.mubr.bf16.gmra.mrb[0].mxu0 %v998
        %v1129 = vpop.f32.mrb[0].mxu0
        %v1130 = vadd.f32 %v1022, %v1129
        %v1131 = vpop.f32.mrb[0].mxu0
        %v1132 = vpop.f32.mrb[0].mxu0
        %v1133 = vadd.f32 %v1022, %v1132
        %v1134 = vpop.f32.mrb[0].mxu0
        %1135 = vmatprep.mubr.bf16.mxu0 0
        %1136 = vmatmul.mubr.bf16.gmra.mrb[0].mxu0 %v999
        %v1137 = vpop.f32.mrb[0].mxu0
        %v1138 = vadd.f32 %v1022, %v1137
        %v1139 = vpop.f32.mrb[0].mxu0
        %v1140 = vpop.f32.mrb[0].mxu0
        %v1141 = vadd.f32 %v1022, %v1140
        %v1142 = vpop.f32.mrb[0].mxu0
        %1143 = vmatprep.mubr.bf16.mxu0 0
        %1144 = vmatmul.mubr.bf16.gmra.mrb[0].mxu0 %v1000
        %v1145 = vpop.f32.mrb[0].mxu0
        %v1146 = vadd.f32 %v1022, %v1145
        %v1147 = vpop.f32.mrb[0].mxu0
        %v1148 = vpop.f32.mrb[0].mxu0
        %v1149 = vadd.f32 %v1022, %v1148
        %v1150 = vpop.f32.mrb[0].mxu0
        %1151 = vmatprep.mubr.bf16.mxu0 0
        %1152 = vmatmul.mubr.bf16.gmra.mrb[0].mxu0 %v1001
        %v1153 = vpop.f32.mrb[0].mxu0
        %v1154 = vadd.f32 %v1022, %v1153
        %v1155 = vpop.f32.mrb[0].mxu0
        %v1156 = vpop.f32.mrb[0].mxu0
        %v1157 = vadd.f32 %v1022, %v1156
        %v1158 = vpop.f32.mrb[0].mxu0
        %1159 = vmatprep.mubr.bf16.mxu0 0
        %1160 = vmatmul.mubr.bf16.gmra.mrb[0].mxu0 %v1002
        %v1161 = vpop.f32.mrb[0].mxu0
        %v1162 = vadd.f32 %v1022, %v1161
        %v1163 = vpop.f32.mrb[0].mxu0
        %v1164 = vpop.f32.mrb[0].mxu0
        %v1165 = vadd.f32 %v1022, %v1164
        %v1166 = vpop.f32.mrb[0].mxu0
        %1167 = vdwg.mxu0
        %1168 = vmax.xlane.f32.xlu0 %v1106
        %v1169 = vpop.xlane.xlu0 %1168
        %1170 = vmax.xlane.f32.xlu0 %v1109
        %v1171 = vpop.xlane.xlu0 %1170
        %1172 = vmax.xlane.f32.xlu0 %v1114
        %v1173 = vpop.xlane.xlu0 %1172
        %1174 = vmax.xlane.f32.xlu0 %v1117
        %v1175 = vpop.xlane.xlu0 %1174
        %1176 = vmax.xlane.f32.xlu0 %v1122
        %v1177 = vpop.xlane.xlu0 %1176
        %1178 = vmax.xlane.f32.xlu0 %v1125
        %v1179 = vpop.xlane.xlu0 %1178
        %1180 = vmax.xlane.f32.xlu0 %v1130
        %v1181 = vpop.xlane.xlu0 %1180
        %1182 = vmax.xlane.f32.xlu0 %v1133
        %v1183 = vpop.xlane.xlu0 %1182
        %1184 = vmax.xlane.f32.xlu0 %v1138
        %v1185 = vpop.xlane.xlu0 %1184
        %1186 = vmax.xlane.f32.xlu0 %v1141
        %v1187 = vpop.xlane.xlu0 %1186
        %1188 = vmax.xlane.f32.xlu0 %v1146
        %v1189 = vpop.xlane.xlu0 %1188
        %1190 = vmax.xlane.f32.xlu0 %v1149
        %v1191 = vpop.xlane.xlu0 %1190
        %1192 = vmax.xlane.f32.xlu0 %v1154
        %v1193 = vpop.xlane.xlu0 %1192
        %1194 = vmax.xlane.f32.xlu0 %v1157
        %v1195 = vpop.xlane.xlu0 %1194
        %1196 = vmax.xlane.f32.xlu0 %v1162
        %v1197 = vpop.xlane.xlu0 %1196
        %1198 = vmax.xlane.f32.xlu0 %v1165
        %v1199 = vpop.xlane.xlu0 %1198
        %v1200 = vsub.f32 %v1106, %v1169
        %v1201 = vsub.f32 %v1109, %v1171
        %v1202 = vsub.f32 %v1114, %v1173
        %v1203 = vsub.f32 %v1117, %v1175
        %v1204 = vsub.f32 %v1122, %v1177
        %v1205 = vsub.f32 %v1125, %v1179
        %v1206 = vsub.f32 %v1130, %v1181
        %v1207 = vsub.f32 %v1133, %v1183
        %v1208 = vsub.f32 %v1138, %v1185
        %v1209 = vsub.f32 %v1141, %v1187
        %v1210 = vsub.f32 %v1146, %v1189
        %v1211 = vsub.f32 %v1149, %v1191
        %v1212 = vsub.f32 %v1154, %v1193
        %v1213 = vsub.f32 %v1157, %v1195
        %v1214 = vsub.f32 %v1162, %v1197
        %v1215 = vsub.f32 %v1165, %v1199
        %v1216 = vmul.f32 %v1200, 1.442695
        %v1217 = vpow.pop %v1216
        %v1218 = vmul.f32 %v1201, 1.442695
        %v1219 = vpow.pop %v1218
        %v1220 = vmul.f32 %v1202, 1.442695
        %v1221 = vpow.pop %v1220
        %v1222 = vmul.f32 %v1203, 1.442695
        %v1223 = vpow.pop %v1222
        %v1224 = vmul.f32 %v1204, 1.442695
        %v1225 = vpow.pop %v1224
        %v1226 = vmul.f32 %v1205, 1.442695
        %v1227 = vpow.pop %v1226
        %v1228 = vmul.f32 %v1206, 1.442695
        %v1229 = vpow.pop %v1228
        %v1230 = vmul.f32 %v1207, 1.442695
        %v1231 = vpow.pop %v1230
        %v1232 = vmul.f32 %v1208, 1.442695
        %v1233 = vpow.pop %v1232
        %v1234 = vmul.f32 %v1209, 1.442695
        %v1235 = vpow.pop %v1234
        %v1236 = vmul.f32 %v1210, 1.442695
        %v1237 = vpow.pop %v1236
        %v1238 = vmul.f32 %v1211, 1.442695
        %v1239 = vpow.pop %v1238
        %v1240 = vmul.f32 %v1212, 1.442695
        %v1241 = vpow.pop %v1240
        %v1242 = vmul.f32 %v1213, 1.442695
        %v1243 = vpow.pop %v1242
        %v1244 = vmul.f32 %v1214, 1.442695
        %v1245 = vpow.pop %v1244
        %v1246 = vmul.f32 %v1215, 1.442695
        %v1247 = vpow.pop %v1246
        %1248 = vadd.xlane.f32.xlu0 %v1217
        %v1249 = vpop.xlane.xlu0 %1248
        %1250 = vadd.xlane.f32.xlu0 %v1219
        %v1251 = vpop.xlane.xlu0 %1250
        %1252 = vadd.xlane.f32.xlu0 %v1221
        %v1253 = vpop.xlane.xlu0 %1252
        %1254 = vadd.xlane.f32.xlu0 %v1223
        %v1255 = vpop.xlane.xlu0 %1254
        %1256 = vadd.xlane.f32.xlu0 %v1225
        %v1257 = vpop.xlane.xlu0 %1256
        %1258 = vadd.xlane.f32.xlu0 %v1227
        %v1259 = vpop.xlane.xlu0 %1258
        %1260 = vadd.xlane.f32.xlu0 %v1229
        %v1261 = vpop.xlane.xlu0 %1260
        %1262 = vadd.xlane.f32.xlu0 %v1231
        %v1263 = vpop.xlane.xlu0 %1262
        %1264 = vadd.xlane.f32.xlu0 %v1233
        %v1265 = vpop.xlane.xlu0 %1264
        %1266 = vadd.xlane.f32.xlu0 %v1235
        %v1267 = vpop.xlane.xlu0 %1266
        %1268 = vadd.xlane.f32.xlu0 %v1237
        %v1269 = vpop.xlane.xlu0 %1268
        %1270 = vadd.xlane.f32.xlu0 %v1239
        %v1271 = vpop.xlane.xlu0 %1270
        %1272 = vadd.xlane.f32.xlu0 %v1241
        %v1273 = vpop.xlane.xlu0 %1272
        %1274 = vadd.xlane.f32.xlu0 %v1243
        %v1275 = vpop.xlane.xlu0 %1274
        %1276 = vadd.xlane.f32.xlu0 %v1245
        %v1277 = vpop.xlane.xlu0 %1276
        %1278 = vadd.xlane.f32.xlu0 %v1247
        %v1279 = vpop.xlane.xlu0 %1278
        %v1280 = vlog2.pop %v1249
        %v1281 = vmul.f32 %v1280, 0.6931472
        %v1282 = vlog2.pop %v1251
        %v1283 = vmul.f32 %v1282, 0.6931472
        %v1284 = vlog2.pop %v1253
        %v1285 = vmul.f32 %v1284, 0.6931472
        %v1286 = vlog2.pop %v1255
        %v1287 = vmul.f32 %v1286, 0.6931472
        %v1288 = vlog2.pop %v1257
        %v1289 = vmul.f32 %v1288, 0.6931472
        %v1290 = vlog2.pop %v1259
        %v1291 = vmul.f32 %v1290, 0.6931472
        %v1292 = vlog2.pop %v1261
        %v1293 = vmul.f32 %v1292, 0.6931472
        %v1294 = vlog2.pop %v1263
        %v1295 = vmul.f32 %v1294, 0.6931472
        %v1296 = vlog2.pop %v1265
        %v1297 = vmul.f32 %v1296, 0.6931472
        %v1298 = vlog2.pop %v1267
        %v1299 = vmul.f32 %v1298, 0.6931472
        %v1300 = vlog2.pop %v1269
        %v1301 = vmul.f32 %v1300, 0.6931472
        %v1302 = vlog2.pop %v1271
        %v1303 = vmul.f32 %v1302, 0.6931472
        %v1304 = vlog2.pop %v1273
        %v1305 = vmul.f32 %v1304, 0.6931472
        %v1306 = vlog2.pop %v1275
        %v1307 = vmul.f32 %v1306, 0.6931472
        %v1308 = vlog2.pop %v1277
        %v1309 = vmul.f32 %v1308, 0.6931472
        %v1310 = vlog2.pop %v1279
        %v1311 = vmul.f32 %v1310, 0.6931472
        %v1312 = vsub.f32 %v1200, %v1281
        %v1313 = vsub.f32 %v1201, %v1283
        %v1314 = vsub.f32 %v1202, %v1285
        %v1315 = vsub.f32 %v1203, %v1287
        %v1316 = vsub.f32 %v1204, %v1289
        %v1317 = vsub.f32 %v1205, %v1291
        %v1318 = vsub.f32 %v1206, %v1293
        %v1319 = vsub.f32 %v1207, %v1295
        %v1320 = vsub.f32 %v1208, %v1297
        %v1321 = vsub.f32 %v1209, %v1299
        %v1322 = vsub.f32 %v1210, %v1301
        %v1323 = vsub.f32 %v1211, %v1303
        %v1324 = vsub.f32 %v1212, %v1305
        %v1325 = vsub.f32 %v1213, %v1307
        %v1326 = vsub.f32 %v1214, %v1309
        %v1327 = vsub.f32 %v1215, %v1311
        %1328 = vst [vmem:[%s257] sm:$0xff] %v1312
        %1329 = vst [vmem:[%s257 + $0x8] sm:$0xff] %v1313
        %1330 = vst [vmem:[%s257 + $0x10] sm:$0xff] %v1314
        %1331 = vst [vmem:[%s257 + $0x18] sm:$0xff] %v1315
        %1332 = vst [vmem:[%s257 + $0x20] sm:$0xff] %v1316
        %1333 = vst [vmem:[%s257 + $0x28] sm:$0xff] %v1317
        %1334 = vst [vmem:[%s257 + $0x30] sm:$0xff] %v1318
        %1335 = vst [vmem:[%s257 + $0x38] sm:$0xff] %v1319
        %1336 = vst [vmem:[%s257 + $0x40] sm:$0xff] %v1320
        %1337 = vst [vmem:[%s257 + $0x48] sm:$0xff] %v1321
        %1338 = vst [vmem:[%s257 + $0x50] sm:$0xff] %v1322
        %1339 = vst [vmem:[%s257 + $0x58] sm:$0xff] %v1323
        %1340 = vst [vmem:[%s257 + $0x60] sm:$0xff] %v1324
        %1341 = vst [vmem:[%s257 + $0x68] sm:$0xff] %v1325
        %1342 = vst [vmem:[%s257 + $0x70] sm:$0xff] %v1326
        %1343 = vst [vmem:[%s257 + $0x78] sm:$0xff] %v1327
        %s1344 = sand.u32 %s120, 1
        %s1345 = scalar_lea.sflag [#allocation4], %s1344
        %s1346 = sand.u32 %s120, 1
        %s1347 = smul.addr %s1346, 128
        %s1348 = scalar_lea.vmem [#allocation10], %s1347
        // Predicated region
        $region53: #{_neuralnet_forward.1} parent=35 // pred_check
          %p1349 = pneg %p130
        $region54: #{_neuralnet_forward.1} parent=35 // pred_check_branch
          %1351 = sbr.rel (%p1349) target = $region56
        $region55: #{_neuralnet_forward.1} parent=35 // pred_region
          %s1352 = smul.u32 16, %s23
          %s1354 = ssub.s32 2048, 2048
          %1355 = vsyncadd %s1345, %s1354
          %s1356 = smul.addr %s1352, 128
          %s1357 = scalar_lea.hbm %s4, %s1356
          %s1358 = sshll.u32 %s1348, 4
          %s1359 = int_to_ptr.vmem [resolvable:$true] %s1358
          %1364 = dma.vmem_to_hbm [thread:$0]  %s1359, 2048, %s1357, %s1345, 128, 128, 8
        $region56: #{_neuralnet_forward.1} parent=35 // pred_fallthru
          _
      $region36: #{_neuralnet_forward.1} parent=5 // pred_fallthru
        _
      %p1365 = scmp.le.s32.totalorder 2, %s18
      // Predicated region
      $region57: #{_neuralnet_forward.1} parent=5 // pred_check
        %p1366 = pneg %p1365
      $region58: #{_neuralnet_forward.1} parent=5 // pred_check_branch
        %1368 = sbr.rel (%p1366) target = $region60
      $region59: #{_neuralnet_forward.1} parent=5 // pred_region
        %s1369 = ssub.s32 %s18, 2
        // Predicated region
        $region61: #{_neuralnet_forward.1} parent=59 // pred_check
          %p1370 = pneg %p136
        $region62: #{_neuralnet_forward.1} parent=59 // pred_check_branch
          %1372 = sbr.rel (%p1370) target = $region64
        $region63: #{_neuralnet_forward.1} parent=59 // pred_region
          %s1373 = sand.u32 %s121, 1
          %s1374 = scalar_lea.sflag [#allocation4], %s1373
          %s1375 = sand.u32 %s121, 1
          %s1376 = smul.addr %s1375, 128
          %s1377 = scalar_lea.vmem [#allocation10], %s1376
          %1378 = dma.done %s1374, 2048
        $region64: #{_neuralnet_forward.1} parent=59 // pred_fallthru
          _
      $region60: #{_neuralnet_forward.1} parent=5 // pred_fallthru
        _
    $region6: #{_neuralnet_forward.1} parent=1 // loop_footer
      %s22 = sadd.s32 1, %s18
    $region7: #{_neuralnet_forward.1} parent=1 // loop_footer_branch
      %17 = sbr.rel target = $region3
    $region8: #{_neuralnet_forward.1} parent=1 // loop_exit
      _
    %1379 = vsyncpa [#allocation3], 1
    %s1380 = scalar_lea.sflag [#allocation3], 1
    %1381 = vsyncpa %s1380, 1
    %1382 = vsyncpa [#allocation6], 1
    %1383 = vsyncpa [#allocation9], 1
    %1384 = vsyncpa [#allocation4], 1
    %s1385 = scalar_lea.sflag [#allocation4], 1
    %1386 = vsyncpa %s1385, 1

</llo_original>
